<compile_context>
chip_gen: v7x
topology: tpu7x:2x2x1
jax: 0.10.0
libtpu: 0.0.40
codegen_flags: <defaults>
</compile_context>

<pallas_src>
import functools

import jax
import jax.numpy as jnp
from jax import lax
from jax.experimental import pallas as pl
from jax.experimental.pallas import tpu as pltpu


# ---------------------------------------------------------------------------
# Fused kernel: single-layer LSTM forward with the (already dropped) weight
# ---------------------------------------------------------------------------
def _wd_lstm_kernel(
    x_ref,        # (tt, Bt, I)   bf16 input time-chunk
    wih_t_ref,    # (I, 4Hp)      bf16 W_ih^T  (resident)
    whh_t_ref,    # (Hp, 4Hp)     bf16 dropped W_hh^T (resident)
    b_ref,        # (1, 4Hp)      f32  b_ih + b_hh (resident)
    y_ref,        # (tt, Bt, Hp)  output time-chunk
    hn_ref,       # (Bt, Hp)      final hidden state (written on last chunk)
    cn_ref,       # (Bt, Hp)      final cell state   (written on last chunk)
    gx,           # VMEM scratch (tt, Bt, 4Hp) f32: hoisted input projection
    h_sc,         # VMEM scratch (Bt, Hp) f32: hidden carry across time chunks
    c_sc,         # VMEM scratch (Bt, Hp) f32: cell   carry across time chunks
    *,
    t_valid,      # real (unpadded) sequence length
    mask_tail,    # static: whether the last chunk contains padded steps
    unroll,       # partial-unroll factor for the recurrence
):
    tt, b_sz, in_dim = x_ref.shape
    hid = whh_t_ref.shape[0]          # Hp (multiple of 128)
    t_idx = pl.program_id(1)

    # --- first time chunk of this batch block: reset the recurrent carry. ---
    @pl.when(t_idx == 0)
    def _init():
        h_sc[...] = jnp.zeros_like(h_sc)
        c_sc[...] = jnp.zeros_like(c_sc)

    # --- hoisted input projection for this chunk: one big bf16 MXU matmul
    #     with f32 accumulation, bias folded in once (not per step). ---------
    gx[...] = (
        jnp.dot(
            x_ref[...].reshape(tt * b_sz, in_dim),
            wih_t_ref[...],
            preferred_element_type=jnp.float32,
        )
        + b_ref[...]
    ).reshape(tt, b_sz, 4 * hid)
    # TODO(synk): double-buffer gx and issue the next chunk's projection while
    # the current chunk's serial h@W_hh chain runs, to fill the MXU bubbles.

    whh = whh_t_ref[...]  # bf16, resident in VMEM

    # --- recurrence: only the small h @ W_hh^T matmul stays in the loop. ----
    def step(i, carry):
        h, c = carry
        gates = gx[i] + jnp.dot(
            h.astype(whh.dtype), whh, preferred_element_type=jnp.float32
        )
        i_g = jax.nn.sigmoid(gates[:, 0:hid])
        f_g = jax.nn.sigmoid(gates[:, hid:2 * hid])
        g_g = jnp.tanh(gates[:, 2 * hid:3 * hid])
        o_g = jax.nn.sigmoid(gates[:, 3 * hid:4 * hid])
        c_new = f_g * c + i_g * g_g
        h_new = o_g * jnp.tanh(c_new)
        y_ref[i] = h_new.astype(y_ref.dtype)   # padded-tail rows are sliced off
        if mask_tail:
            # Keep the carry frozen on padded tail steps (scalar 0/1 blend
            # avoids any boolean-broadcast lowering concerns).
            keep = ((t_idx * tt + i) < t_valid).astype(jnp.float32)
            h_new = keep * h_new + (1.0 - keep) * h
            c_new = keep * c_new + (1.0 - keep) * c
        return (h_new, c_new)

    h_t, c_t = lax.fori_loop(0, tt, step, (h_sc[...], c_sc[...]),
                             unroll=unroll)

    # Carry across time chunks (f32 scratch, stays in VMEM).
    h_sc[...] = h_t
    c_sc[...] = c_t

    # Final states are only materialized on the last time chunk.
    @pl.when(t_idx == pl.num_programs(1) - 1)
    def _final():
        hn_ref[...] = h_t.astype(hn_ref.dtype)
        cn_ref[...] = c_t.astype(cn_ref.dtype)


# ---------------------------------------------------------------------------
# WeightDrop.forward equivalent
# ---------------------------------------------------------------------------
def _round_up(v, m):
    return (v + m - 1) // m * m


def _pad_gate_dim(w, h, hp):
    """Pad a PyTorch gate-stacked (4*h, ...) array to (4*hp, ...), per gate."""
    if hp == h:
        return w
    w4 = w.reshape((4, h) + w.shape[1:])
    pad = [(0, 0), (0, hp - h)] + [(0, 0)] * (w4.ndim - 2)
    return jnp.pad(w4, pad).reshape((4 * hp,) + w.shape[1:])


def weight_drop_lstm_forward(x, params, weight_p, dropout_key, training=True,
                             t_block=32, vmem_budget_bytes=24 << 20):
    """Returns (w_hh_dropped, (y, (h_n, c_n))) — matching WeightDrop(LSTM)."""
    w_ih, w_hh_raw, b_ih, b_hh = params
    T, B, I = x.shape
    H = w_hh_raw.shape[1]
    out_dtype = x.dtype

    # --- _setweights(): F.dropout(raw_w, p, training), inverted dropout. ----
    # Random draw + mask application are a single cheap elementwise op on the
    # (4H, H) weight; the LSTM kernel receives the already-dropped weight so
    # only ONE weight panel is resident in VMEM.
    if training and weight_p > 0.0:
        keep = jax.random.bernoulli(dropout_key, 1.0 - weight_p, w_hh_raw.shape)
        w_hh_dropped = jnp.where(keep, w_hh_raw / (1.0 - weight_p), 0.0)
    else:
        w_hh_dropped = w_hh_raw

    # --- TPU layout padding: H -> multiple of 128 (lane-dense gate slices and
    #     outputs), B -> multiple of 8 (free sublane merge of (tt*B, I)). -----
    Hp = _round_up(H, 128)
    Bp = _round_up(B, 8)

    w_ih_p = _pad_gate_dim(w_ih, H, Hp)                        # (4Hp, I)
    w_hh_p = _pad_gate_dim(w_hh_dropped, H, Hp)                # (4Hp, H)
    if Hp != H:
        w_hh_p = jnp.pad(w_hh_p, ((0, 0), (0, Hp - H)))        # (4Hp, Hp)
    b_p = _pad_gate_dim(b_ih + b_hh, H, Hp).reshape(1, 4 * Hp)  # (1, 4Hp)

    # bf16 MXU feeds; f32 bias / accumulation.
    wih_t = jnp.transpose(w_ih_p).astype(jnp.bfloat16)         # (I, 4Hp)
    whh_t = jnp.transpose(w_hh_p).astype(jnp.bfloat16)         # (Hp, 4Hp)
    b_vec = b_p.astype(jnp.float32)

    x_p = x
    if Bp != B:
        x_p = jnp.pad(x_p, ((0, 0), (0, Bp - B), (0, 0)))
    x_p = x_p.astype(jnp.bfloat16)

    # --- batch blocking: leading "parallel" grid axis (uses v7x's 2nd TC). ---
    nb = 2 if (Bp % 16 == 0) else 1
    Bt = Bp // nb

    # --- time chunk: as large as t_block / T allow, bounded by a VMEM budget.
    out_isz = jnp.dtype(out_dtype).itemsize

    def vmem_estimate(tt_):
        bf16, f32 = 2, 4
        return (2 * tt_ * Bt * I * bf16            # x double buffer
                + 2 * tt_ * Bt * Hp * out_isz      # y double buffer
                + 2 * I * 4 * Hp * bf16            # W_ih^T (double-buffered)
                + 2 * Hp * 4 * Hp * bf16           # W_hh^T (double-buffered)
                + 2 * 4 * Hp * f32                 # bias
                + 2 * 2 * Bt * Hp * out_isz        # h_n / c_n blocks
                + tt_ * Bt * 4 * Hp * f32          # gx scratch
                + 2 * Bt * Hp * f32)               # h/c carry scratch

    tt = max(1, min(t_block, T))
    while tt > 1 and vmem_estimate(tt) > vmem_budget_bytes:
        tt = max(1, tt // 2)
    # NOTE: the constant-index weight panels are still double-buffered by the
    # default pipeliner; pipeline_mode=pl.Buffered(1) would halve their VMEM.

    Tp = _round_up(T, tt)
    if Tp != T:
        x_p = jnp.pad(x_p, ((0, Tp - T), (0, 0), (0, 0)))
    nt = Tp // tt

    vmem_limit = min(max(2 * vmem_estimate(tt), 32 << 20), 48 << 20)

    kernel = functools.partial(
        _wd_lstm_kernel,
        t_valid=T,
        mask_tail=(Tp != T),
        unroll=min(4, tt),
    )

    y_p, h_n_p, c_n_p = pl.pallas_call(
        kernel,
        out_shape=(
            jax.ShapeDtypeStruct((Tp, Bp, Hp), out_dtype),
            jax.ShapeDtypeStruct((Bp, Hp), out_dtype),
            jax.ShapeDtypeStruct((Bp, Hp), out_dtype),
        ),
        grid_spec=pltpu.PrefetchScalarGridSpec(
            num_scalar_prefetch=0,
            grid=(nb, nt),
            in_specs=[
                pl.BlockSpec((tt, Bt, I), lambda b, t: (t, b, 0)),   # x: streamed
                pl.BlockSpec((I, 4 * Hp), lambda b, t: (0, 0)),      # W_ih^T (resident)
                pl.BlockSpec((Hp, 4 * Hp), lambda b, t: (0, 0)),     # dropped W_hh^T (resident)
                pl.BlockSpec((1, 4 * Hp), lambda b, t: (0, 0)),      # bias (resident)
            ],
            out_specs=(
                pl.BlockSpec((tt, Bt, Hp), lambda b, t: (t, b, 0)),  # y: streamed
                pl.BlockSpec((Bt, Hp), lambda b, t: (b, 0)),         # h_n
                pl.BlockSpec((Bt, Hp), lambda b, t: (b, 0)),         # c_n
            ),
            scratch_shapes=[
                pltpu.VMEM((tt, Bt, 4 * Hp), jnp.float32),  # hoisted projection
                pltpu.VMEM((Bt, Hp), jnp.float32),          # h carry
                pltpu.VMEM((Bt, Hp), jnp.float32),          # c carry
            ],
        ),
        compiler_params=pltpu.CompilerParams(
            # batch blocks are independent -> parallel; time is the recurrence.
            dimension_semantics=("parallel", "arbitrary"),
            vmem_limit_bytes=int(vmem_limit),
        ),
    )(x_p, wih_t, whh_t, b_vec)

    y = y_p[:T, :B, :H]
    h_n = h_n_p[:B, :H]
    c_n = c_n_p[:B, :H]
    return w_hh_dropped, (y, (h_n, c_n))


# ---------------------------------------------------------------------------
# Pure-JAX reference (mirrors the kernel's bf16-matmul / f32-accumulate math)
# ---------------------------------------------------------------------------
def lstm_reference(x, w_ih, w_hh, b_ih, b_hh):
    T, B, _ = x.shape
    H = w_hh.shape[1]
    cd = jnp.bfloat16
    xc = x.astype(cd)
    wih_t = jnp.transpose(w_ih).astype(cd)
    whh_t = jnp.transpose(w_hh).astype(cd)
    b = (b_ih + b_hh).astype(jnp.float32)
    h = jnp.zeros((B, H), jnp.float32)
    c = jnp.zeros((B, H), jnp.float32)
    ys = []
    for t in range(T):
        gates = (
            jnp.dot(xc[t], wih_t, preferred_element_type=jnp.float32)
            + jnp.dot(h.astype(cd), whh_t, preferred_element_type=jnp.float32)
            + b
        )
        i_g = jax.nn.sigmoid(gates[:, 0:H])
        f_g = jax.nn.sigmoid(gates[:, H:2 * H])
        g_g = jnp.tanh(gates[:, 2 * H:3 * H])
        o_g = jax.nn.sigmoid(gates[:, 3 * H:4 * H])
        c = f_g * c + i_g * g_g
        h = o_g * jnp.tanh(c)
        ys.append(h)
    return jnp.stack(ys, 0), h, c


if __name__ == "__main__":
    # Small, deterministic shapes exercising: H padding (32 -> 128), B padding
    # + batch blocking (12 -> 16 = 2 blocks of 8), and time padding/masking
    # (T=10 with t_block=4 -> Tp=12, 2 masked tail steps).
    T, B, I, H = 10, 12, 20, 32
    weight_p = 0.5

    key = jax.random.PRNGKey(0)
    k1, k2, k3, k4, k5, kdrop = jax.random.split(key, 6)
    bound = 1.0 / (H ** 0.5)  # PyTorch LSTM default init range
    w_ih = jax.random.uniform(k1, (4 * H, I), jnp.float32, -bound, bound)
    w_hh_raw = jax.random.uniform(k2, (4 * H, H), jnp.float32, -bound, bound)
    b_ih = jax.random.uniform(k3, (4 * H,), jnp.float32, -bound, bound)
    b_hh = jax.random.uniform(k4, (4 * H,), jnp.float32, -bound, bound)
    x = jax.random.normal(k5, (T, B, I), jnp.float32)

    # Training-mode forward (small t_block so the time-grid carry + tail
    # masking are exercised).
    w_hh_dropped, (y, (h_n, c_n)) = weight_drop_lstm_forward(
        x, (w_ih, w_hh_raw, b_ih, b_hh), weight_p, kdrop, training=True,
        t_block=4,
    )
    jax.block_until_ready((w_hh_dropped, y, h_n, c_n))

    # Dropout semantics: every element is either 0 or raw / (1 - p), and both
    # dropped and kept elements occur.
    scale = 1.0 / (1.0 - weight_p)
    is_zero = w_hh_dropped == 0.0
    assert bool(
        jnp.all(
            jnp.where(
                is_zero, True, jnp.isclose(w_hh_dropped, w_hh_raw * scale, atol=1e-6)
            )
        )
    ), "weight dropout mismatch"
    n_zero = int(is_zero.sum())
    assert 0 < n_zero < w_hh_dropped.size, "degenerate dropout mask"

    # LSTM kernel vs pure-JAX reference using the same dropped weight
    # (reference mirrors the kernel's bf16 matmul inputs / f32 accumulation).
    y_ref, h_ref, c_ref = lstm_reference(x, w_ih, w_hh_dropped, b_ih, b_hh)
    assert bool(jnp.allclose(y, y_ref, atol=5e-3, rtol=5e-3)), "LSTM output mismatch"
    assert bool(jnp.allclose(h_n, h_ref, atol=5e-3, rtol=5e-3)), "h_n mismatch"
    assert bool(jnp.allclose(c_n, c_ref, atol=5e-3, rtol=5e-3)), "c_n mismatch"

    # Eval mode: F.dropout(training=False) is the identity (default t_block,
    # single time chunk, no tail masking path).
    w_eval, (y_eval, _) = weight_drop_lstm_forward(
        x, (w_ih, w_hh_raw, b_ih, b_hh), weight_p, kdrop, training=False,
    )
    jax.block_until_ready(y_eval)
    y_ref_eval, _, _ = lstm_reference(x, w_ih, w_hh_raw, b_ih, b_hh)
    assert bool(jnp.allclose(w_eval, w_hh_raw)), "eval-mode weight should be unchanged"
    assert bool(jnp.allclose(y_eval, y_ref_eval, atol=5e-3, rtol=5e-3)), "eval LSTM mismatch"

    print("KERNEL_OK")
</pallas_src>

<mosaic_0001>
module attributes {stable_mosaic.version = 11 : i64} {
  func.func @_wd_lstm_kernel(%arg0: i32, %arg1: i32, %arg2: memref<4x8x20xbf16, #tpu.memory_space<vmem>>, %arg3: memref<20x512xbf16, #tpu.memory_space<vmem>>, %arg4: memref<128x512xbf16, #tpu.memory_space<vmem>>, %arg5: memref<1x512xf32, #tpu.memory_space<vmem>>, %arg6: memref<4x8x128xf32, #tpu.memory_space<vmem>>, %arg7: memref<8x128xf32, #tpu.memory_space<vmem>>, %arg8: memref<8x128xf32, #tpu.memory_space<vmem>>, %arg9: memref<4x8x512xf32, #tpu.memory_space<vmem>>, %arg10: memref<8x128xf32, #tpu.memory_space<vmem>>, %arg11: memref<8x128xf32, #tpu.memory_space<vmem>>) attributes {dimension_semantics = [#tpu.dimension_semantics<parallel>, #tpu.dimension_semantics<arbitrary>], iteration_bounds = array<i64: 2, 3>, scalar_prefetch = 0 : i64, scratch_operands = 3 : i64, tpu.core_type = #tpu.core_type<tc>, window_params = [{transform_indices = @transform_0, window_bounds = array<i64: 4, 8, 20>}, {pipeline_mode = #tpu.pipeline_mode<synchronous>, transform_indices = @transform_1, window_bounds = array<i64: 20, 512>}, {pipeline_mode = #tpu.pipeline_mode<synchronous>, transform_indices = @transform_2, window_bounds = array<i64: 128, 512>}, {pipeline_mode = #tpu.pipeline_mode<synchronous>, transform_indices = @transform_3, window_bounds = array<i64: 1, 512>}, {transform_indices = @transform_4, window_bounds = array<i64: 4, 8, 128>}, {transform_indices = @transform_5, window_bounds = array<i64: 8, 128>}, {transform_indices = @transform_6, window_bounds = array<i64: 8, 128>}]} {
    %c0_i32 = arith.constant 0 : i32
    %0 = arith.cmpi eq, %arg1, %c0_i32 : i32
    %1 = arith.extui %0 : i1 to i32
    %c0_i32_0 = arith.constant 0 : i32
    %2 = arith.cmpi ne, %1, %c0_i32_0 : i32
    scf.if %2 {
      %cst_70 = arith.constant 0.000000e+00 : f32
      %228 = vector.broadcast %cst_70 : f32 to vector<8x128xf32>
      %c0_71 = arith.constant 0 : index
      %c0_72 = arith.constant 0 : index
      %229 = vector.load %arg10[%c0_71, %c0_72] : memref<8x128xf32, #tpu.memory_space<vmem>>, vector<8x128xf32>
      tpu.vector_store %arg10[%c0_71, %c0_72], %228 {strides = array<i32>} : memref<8x128xf32, #tpu.memory_space<vmem>>, vector<8x128xf32>,
      %cst_73 = arith.constant 0.000000e+00 : f32
      %230 = vector.broadcast %cst_73 : f32 to vector<8x128xf32>
      %c0_74 = arith.constant 0 : index
      %c0_75 = arith.constant 0 : index
      %231 = vector.load %arg11[%c0_74, %c0_75] : memref<8x128xf32, #tpu.memory_space<vmem>>, vector<8x128xf32>
      tpu.vector_store %arg11[%c0_74, %c0_75], %230 {strides = array<i32>} : memref<8x128xf32, #tpu.memory_space<vmem>>, vector<8x128xf32>,
    } else {
    }
    %c0 = arith.constant 0 : index
    %c0_1 = arith.constant 0 : index
    %c0_2 = arith.constant 0 : index
    %3 = vector.load %arg2[%c0, %c0_1, %c0_2] : memref<4x8x20xbf16, #tpu.memory_space<vmem>>, vector<4x8x20xbf16>
    %4 = vector.shape_cast %3 : vector<4x8x20xbf16> to vector<32x20xbf16>
    %c0_3 = arith.constant 0 : index
    %c0_4 = arith.constant 0 : index
    %5 = vector.load %arg3[%c0_3, %c0_4] : memref<20x512xbf16, #tpu.memory_space<vmem>>, vector<20x512xbf16>
    %cst = arith.constant dense<0.000000e+00> : vector<32x512xf32>
    %6 = tpu.matmul %4, %5, %cst {dimension_numbers = #tpu.dot_dimension_numbers<[1], [0], [0], [1], [0, 0, 1, 1], [], []>} : vector<32x20xbf16>, vector<20x512xbf16>, vector<32x512xf32> -> vector<32x512xf32>
    %c0_5 = arith.constant 0 : index
    %c0_6 = arith.constant 0 : index
    %7 = vector.load %arg5[%c0_5, %c0_6] : memref<1x512xf32, #tpu.memory_space<vmem>>, vector<1x512xf32>
    %8 = vector.broadcast %7 : vector<1x512xf32> to vector<32x512xf32>
    %9 = arith.addf %6, %8 : vector<32x512xf32>
    %10 = vector.shape_cast %9 : vector<32x512xf32> to vector<4x8x512xf32>
    %c0_7 = arith.constant 0 : index
    %c0_8 = arith.constant 0 : index
    %c0_9 = arith.constant 0 : index
    %11 = vector.load %arg9[%c0_7, %c0_8, %c0_9] : memref<4x8x512xf32, #tpu.memory_space<vmem>>, vector<4x8x512xf32>
    tpu.vector_store %arg9[%c0_7, %c0_8, %c0_9], %10 {strides = array<i32>} : memref<4x8x512xf32, #tpu.memory_space<vmem>>, vector<4x8x512xf32>,
    %c0_10 = arith.constant 0 : index
    %c0_11 = arith.constant 0 : index
    %12 = vector.load %arg4[%c0_10, %c0_11] : memref<128x512xbf16, #tpu.memory_space<vmem>>, vector<128x512xbf16>
    %c0_12 = arith.constant 0 : index
    %c0_13 = arith.constant 0 : index
    %13 = vector.load %arg10[%c0_12, %c0_13] : memref<8x128xf32, #tpu.memory_space<vmem>>, vector<8x128xf32>
    %c0_14 = arith.constant 0 : index
    %c0_15 = arith.constant 0 : index
    %14 = vector.load %arg11[%c0_14, %c0_15] : memref<8x128xf32, #tpu.memory_space<vmem>>, vector<8x128xf32>
    %c0_i32_16 = arith.constant 0 : i32
    %15 = arith.index_cast %c0_i32_16 : i32 to index
    %c0_17 = arith.constant 0 : index
    %c0_18 = arith.constant 0 : index
    %16 = vector.load %arg9[%15, %c0_17, %c0_18] : memref<4x8x512xf32, #tpu.memory_space<vmem>>, vector<1x8x512xf32>
    %17 = vector.shape_cast %16 : vector<1x8x512xf32> to vector<8x512xf32>
    %18 = arith.truncf %13 : vector<8x128xf32> to vector<8x128xbf16>
    %cst_19 = arith.constant dense<0.000000e+00> : vector<8x512xf32>
    %19 = tpu.matmul %18, %12, %cst_19 {dimension_numbers = #tpu.dot_dimension_numbers<[1], [0], [0], [1], [0, 0, 1, 1], [], []>} : vector<8x128xbf16>, vector<128x512xbf16>, vector<8x512xf32> -> vector<8x512xf32>
    %20 = arith.addf %17, %19 : vector<8x512xf32>
    %21 = vector.extract_strided_slice %20 {offsets = [0, 0], sizes = [8, 128], strides = [1, 1]} : vector<8x512xf32> to vector<8x128xf32>
    %22 = arith.negf %21 : vector<8x128xf32>
    %23 = math.exp %22 : vector<8x128xf32>
    %cst_20 = arith.constant 1.000000e+00 : f32
    %24 = vector.broadcast %cst_20 : f32 to vector<8x128xf32>
    %25 = arith.addf %24, %23 : vector<8x128xf32>
    %26 = arith.divf %24, %25 : vector<8x128xf32>
    %27 = vector.extract_strided_slice %20 {offsets = [0, 128], sizes = [8, 128], strides = [1, 1]} : vector<8x512xf32> to vector<8x128xf32>
    %28 = arith.negf %27 : vector<8x128xf32>
    %29 = math.exp %28 : vector<8x128xf32>
    %cst_21 = arith.constant 1.000000e+00 : f32
    %30 = vector.broadcast %cst_21 : f32 to vector<8x128xf32>
    %31 = arith.addf %30, %29 : vector<8x128xf32>
    %32 = arith.divf %30, %31 : vector<8x128xf32>
    %33 = vector.extract_strided_slice %20 {offsets = [0, 256], sizes = [8, 128], strides = [1, 1]} : vector<8x512xf32> to vector<8x128xf32>
    %34 = math.tanh %33 : vector<8x128xf32>
    %35 = vector.extract_strided_slice %20 {offsets = [0, 384], sizes = [8, 128], strides = [1, 1]} : vector<8x512xf32> to vector<8x128xf32>
    %36 = arith.negf %35 : vector<8x128xf32>
    %37 = math.exp %36 : vector<8x128xf32>
    %cst_22 = arith.constant 1.000000e+00 : f32
    %38 = vector.broadcast %cst_22 : f32 to vector<8x128xf32>
    %39 = arith.addf %38, %37 : vector<8x128xf32>
    %40 = arith.divf %38, %39 : vector<8x128xf32>
    %41 = arith.mulf %32, %14 : vector<8x128xf32>
    %42 = arith.mulf %26, %34 : vector<8x128xf32>
    %43 = arith.addf %41, %42 : vector<8x128xf32>
    %44 = math.tanh %43 : vector<8x128xf32>
    %45 = arith.mulf %40, %44 : vector<8x128xf32>
    %46 = arith.index_cast %c0_i32_16 : i32 to index
    %c0_23 = arith.constant 0 : index
    %c0_24 = arith.constant 0 : index
    %47 = vector.load %arg6[%46, %c0_23, %c0_24] : memref<4x8x128xf32, #tpu.memory_space<vmem>>, vector<1x8x128xf32>
    %48 = vector.shape_cast %47 : vector<1x8x128xf32> to vector<8x128xf32>
    %49 = vector.shape_cast %45 : vector<8x128xf32> to vector<1x8x128xf32>
    tpu.vector_store %arg6[%46, %c0_23, %c0_24], %49 {strides = array<i32>} : memref<4x8x128xf32, #tpu.memory_space<vmem>>, vector<1x8x128xf32>,
    %c4_i32 = arith.constant 4 : i32
    %50 = arith.muli %arg1, %c4_i32 : i32
    %51 = arith.addi %50, %c0_i32_16 : i32
    %c10_i32 = arith.constant 10 : i32
    %52 = arith.cmpi slt, %51, %c10_i32 : i32
    %53 = arith.extui %52 : i1 to i32
    %54 = arith.sitofp %53 : i32 to f32
    %55 = vector.broadcast %54 : f32 to vector<8x128xf32>
    %56 = arith.mulf %55, %45 : vector<8x128xf32>
    %cst_25 = arith.constant 1.000000e+00 : f32
    %57 = arith.subf %cst_25, %54 : f32
    %58 = vector.broadcast %57 : f32 to vector<8x128xf32>
    %59 = arith.mulf %58, %13 : vector<8x128xf32>
    %60 = arith.addf %56, %59 : vector<8x128xf32>
    %61 = vector.broadcast %54 : f32 to vector<8x128xf32>
    %62 = arith.mulf %61, %43 : vector<8x128xf32>
    %cst_26 = arith.constant 1.000000e+00 : f32
    %63 = arith.subf %cst_26, %54 : f32
    %64 = vector.broadcast %63 : f32 to vector<8x128xf32>
    %65 = arith.mulf %64, %14 : vector<8x128xf32>
    %66 = arith.addf %62, %65 : vector<8x128xf32>
    %c1_i32 = arith.constant 1 : i32
    %67 = arith.index_cast %c1_i32 : i32 to index
    %c0_27 = arith.constant 0 : index
    %c0_28 = arith.constant 0 : index
    %68 = vector.load %arg9[%67, %c0_27, %c0_28] : memref<4x8x512xf32, #tpu.memory_space<vmem>>, vector<1x8x512xf32>
    %69 = vector.shape_cast %68 : vector<1x8x512xf32> to vector<8x512xf32>
    %70 = arith.truncf %60 : vector<8x128xf32> to vector<8x128xbf16>
    %cst_29 = arith.constant dense<0.000000e+00> : vector<8x512xf32>
    %71 = tpu.matmul %70, %12, %cst_29 {dimension_numbers = #tpu.dot_dimension_numbers<[1], [0], [0], [1], [0, 0, 1, 1], [], []>} : vector<8x128xbf16>, vector<128x512xbf16>, vector<8x512xf32> -> vector<8x512xf32>
    %72 = arith.addf %69, %71 : vector<8x512xf32>
    %73 = vector.extract_strided_slice %72 {offsets = [0, 0], sizes = [8, 128], strides = [1, 1]} : vector<8x512xf32> to vector<8x128xf32>
    %74 = arith.negf %73 : vector<8x128xf32>
    %75 = math.exp %74 : vector<8x128xf32>
    %cst_30 = arith.constant 1.000000e+00 : f32
    %76 = vector.broadcast %cst_30 : f32 to vector<8x128xf32>
    %77 = arith.addf %76, %75 : vector<8x128xf32>
    %78 = arith.divf %76, %77 : vector<8x128xf32>
    %79 = vector.extract_strided_slice %72 {offsets = [0, 128], sizes = [8, 128], strides = [1, 1]} : vector<8x512xf32> to vector<8x128xf32>
    %80 = arith.negf %79 : vector<8x128xf32>
    %81 = math.exp %80 : vector<8x128xf32>
    %cst_31 = arith.constant 1.000000e+00 : f32
    %82 = vector.broadcast %cst_31 : f32 to vector<8x128xf32>
    %83 = arith.addf %82, %81 : vector<8x128xf32>
    %84 = arith.divf %82, %83 : vector<8x128xf32>
    %85 = vector.extract_strided_slice %72 {offsets = [0, 256], sizes = [8, 128], strides = [1, 1]} : vector<8x512xf32> to vector<8x128xf32>
    %86 = math.tanh %85 : vector<8x128xf32>
    %87 = vector.extract_strided_slice %72 {offsets = [0, 384], sizes = [8, 128], strides = [1, 1]} : vector<8x512xf32> to vector<8x128xf32>
    %88 = arith.negf %87 : vector<8x128xf32>
    %89 = math.exp %88 : vector<8x128xf32>
    %cst_32 = arith.constant 1.000000e+00 : f32
    %90 = vector.broadcast %cst_32 : f32 to vector<8x128xf32>
    %91 = arith.addf %90, %89 : vector<8x128xf32>
    %92 = arith.divf %90, %91 : vector<8x128xf32>
    %93 = arith.mulf %84, %66 : vector<8x128xf32>
    %94 = arith.mulf %78, %86 : vector<8x128xf32>
    %95 = arith.addf %93, %94 : vector<8x128xf32>
    %96 = math.tanh %95 : vector<8x128xf32>
    %97 = arith.mulf %92, %96 : vector<8x128xf32>
    %98 = arith.index_cast %c1_i32 : i32 to index
    %c0_33 = arith.constant 0 : index
    %c0_34 = arith.constant 0 : index
    %99 = vector.load %arg6[%98, %c0_33, %c0_34] : memref<4x8x128xf32, #tpu.memory_space<vmem>>, vector<1x8x128xf32>
    %100 = vector.shape_cast %99 : vector<1x8x128xf32> to vector<8x128xf32>
    %101 = vector.shape_cast %97 : vector<8x128xf32> to vector<1x8x128xf32>
    tpu.vector_store %arg6[%98, %c0_33, %c0_34], %101 {strides = array<i32>} : memref<4x8x128xf32, #tpu.memory_space<vmem>>, vector<1x8x128xf32>,
    %c4_i32_35 = arith.constant 4 : i32
    %102 = arith.muli %arg1, %c4_i32_35 : i32
    %103 = arith.addi %102, %c1_i32 : i32
    %c10_i32_36 = arith.constant 10 : i32
    %104 = arith.cmpi slt, %103, %c10_i32_36 : i32
    %105 = arith.extui %104 : i1 to i32
    %106 = arith.sitofp %105 : i32 to f32
    %107 = vector.broadcast %106 : f32 to vector<8x128xf32>
    %108 = arith.mulf %107, %97 : vector<8x128xf32>
    %cst_37 = arith.constant 1.000000e+00 : f32
    %109 = arith.subf %cst_37, %106 : f32
    %110 = vector.broadcast %109 : f32 to vector<8x128xf32>
    %111 = arith.mulf %110, %60 : vector<8x128xf32>
    %112 = arith.addf %108, %111 : vector<8x128xf32>
    %113 = vector.broadcast %106 : f32 to vector<8x128xf32>
    %114 = arith.mulf %113, %95 : vector<8x128xf32>
    %cst_38 = arith.constant 1.000000e+00 : f32
    %115 = arith.subf %cst_38, %106 : f32
    %116 = vector.broadcast %115 : f32 to vector<8x128xf32>
    %117 = arith.mulf %116, %66 : vector<8x128xf32>
    %118 = arith.addf %114, %117 : vector<8x128xf32>
    %c2_i32 = arith.constant 2 : i32
    %119 = arith.index_cast %c2_i32 : i32 to index
    %c0_39 = arith.constant 0 : index
    %c0_40 = arith.constant 0 : index
    %120 = vector.load %arg9[%119, %c0_39, %c0_40] : memref<4x8x512xf32, #tpu.memory_space<vmem>>, vector<1x8x512xf32>
    %121 = vector.shape_cast %120 : vector<1x8x512xf32> to vector<8x512xf32>
    %122 = arith.truncf %112 : vector<8x128xf32> to vector<8x128xbf16>
    %cst_41 = arith.constant dense<0.000000e+00> : vector<8x512xf32>
    %123 = tpu.matmul %122, %12, %cst_41 {dimension_numbers = #tpu.dot_dimension_numbers<[1], [0], [0], [1], [0, 0, 1, 1], [], []>} : vector<8x128xbf16>, vector<128x512xbf16>, vector<8x512xf32> -> vector<8x512xf32>
    %124 = arith.addf %121, %123 : vector<8x512xf32>
    %125 = vector.extract_strided_slice %124 {offsets = [0, 0], sizes = [8, 128], strides = [1, 1]} : vector<8x512xf32> to vector<8x128xf32>
    %126 = arith.negf %125 : vector<8x128xf32>
    %127 = math.exp %126 : vector<8x128xf32>
    %cst_42 = arith.constant 1.000000e+00 : f32
    %128 = vector.broadcast %cst_42 : f32 to vector<8x128xf32>
    %129 = arith.addf %128, %127 : vector<8x128xf32>
    %130 = arith.divf %128, %129 : vector<8x128xf32>
    %131 = vector.extract_strided_slice %124 {offsets = [0, 128], sizes = [8, 128], strides = [1, 1]} : vector<8x512xf32> to vector<8x128xf32>
    %132 = arith.negf %131 : vector<8x128xf32>
    %133 = math.exp %132 : vector<8x128xf32>
    %cst_43 = arith.constant 1.000000e+00 : f32
    %134 = vector.broadcast %cst_43 : f32 to vector<8x128xf32>
    %135 = arith.addf %134, %133 : vector<8x128xf32>
    %136 = arith.divf %134, %135 : vector<8x128xf32>
    %137 = vector.extract_strided_slice %124 {offsets = [0, 256], sizes = [8, 128], strides = [1, 1]} : vector<8x512xf32> to vector<8x128xf32>
    %138 = math.tanh %137 : vector<8x128xf32>
    %139 = vector.extract_strided_slice %124 {offsets = [0, 384], sizes = [8, 128], strides = [1, 1]} : vector<8x512xf32> to vector<8x128xf32>
    %140 = arith.negf %139 : vector<8x128xf32>
    %141 = math.exp %140 : vector<8x128xf32>
    %cst_44 = arith.constant 1.000000e+00 : f32
    %142 = vector.broadcast %cst_44 : f32 to vector<8x128xf32>
    %143 = arith.addf %142, %141 : vector<8x128xf32>
    %144 = arith.divf %142, %143 : vector<8x128xf32>
    %145 = arith.mulf %136, %118 : vector<8x128xf32>
    %146 = arith.mulf %130, %138 : vector<8x128xf32>
    %147 = arith.addf %145, %146 : vector<8x128xf32>
    %148 = math.tanh %147 : vector<8x128xf32>
    %149 = arith.mulf %144, %148 : vector<8x128xf32>
    %150 = arith.index_cast %c2_i32 : i32 to index
    %c0_45 = arith.constant 0 : index
    %c0_46 = arith.constant 0 : index
    %151 = vector.load %arg6[%150, %c0_45, %c0_46] : memref<4x8x128xf32, #tpu.memory_space<vmem>>, vector<1x8x128xf32>
    %152 = vector.shape_cast %151 : vector<1x8x128xf32> to vector<8x128xf32>
    %153 = vector.shape_cast %149 : vector<8x128xf32> to vector<1x8x128xf32>
    tpu.vector_store %arg6[%150, %c0_45, %c0_46], %153 {strides = array<i32>} : memref<4x8x128xf32, #tpu.memory_space<vmem>>, vector<1x8x128xf32>,
    %c4_i32_47 = arith.constant 4 : i32
    %154 = arith.muli %arg1, %c4_i32_47 : i32
    %155 = arith.addi %154, %c2_i32 : i32
    %c10_i32_48 = arith.constant 10 : i32
    %156 = arith.cmpi slt, %155, %c10_i32_48 : i32
    %157 = arith.extui %156 : i1 to i32
    %158 = arith.sitofp %157 : i32 to f32
    %159 = vector.broadcast %158 : f32 to vector<8x128xf32>
    %160 = arith.mulf %159, %149 : vector<8x128xf32>
    %cst_49 = arith.constant 1.000000e+00 : f32
    %161 = arith.subf %cst_49, %158 : f32
    %162 = vector.broadcast %161 : f32 to vector<8x128xf32>
    %163 = arith.mulf %162, %112 : vector<8x128xf32>
    %164 = arith.addf %160, %163 : vector<8x128xf32>
    %165 = vector.broadcast %158 : f32 to vector<8x128xf32>
    %166 = arith.mulf %165, %147 : vector<8x128xf32>
    %cst_50 = arith.constant 1.000000e+00 : f32
    %167 = arith.subf %cst_50, %158 : f32
    %168 = vector.broadcast %167 : f32 to vector<8x128xf32>
    %169 = arith.mulf %168, %118 : vector<8x128xf32>
    %170 = arith.addf %166, %169 : vector<8x128xf32>
    %c3_i32 = arith.constant 3 : i32
    %171 = arith.index_cast %c3_i32 : i32 to index
    %c0_51 = arith.constant 0 : index
    %c0_52 = arith.constant 0 : index
    %172 = vector.load %arg9[%171, %c0_51, %c0_52] : memref<4x8x512xf32, #tpu.memory_space<vmem>>, vector<1x8x512xf32>
    %173 = vector.shape_cast %172 : vector<1x8x512xf32> to vector<8x512xf32>
    %174 = arith.truncf %164 : vector<8x128xf32> to vector<8x128xbf16>
    %cst_53 = arith.constant dense<0.000000e+00> : vector<8x512xf32>
    %175 = tpu.matmul %174, %12, %cst_53 {dimension_numbers = #tpu.dot_dimension_numbers<[1], [0], [0], [1], [0, 0, 1, 1], [], []>} : vector<8x128xbf16>, vector<128x512xbf16>, vector<8x512xf32> -> vector<8x512xf32>
    %176 = arith.addf %173, %175 : vector<8x512xf32>
    %177 = vector.extract_strided_slice %176 {offsets = [0, 0], sizes = [8, 128], strides = [1, 1]} : vector<8x512xf32> to vector<8x128xf32>
    %178 = arith.negf %177 : vector<8x128xf32>
    %179 = math.exp %178 : vector<8x128xf32>
    %cst_54 = arith.constant 1.000000e+00 : f32
    %180 = vector.broadcast %cst_54 : f32 to vector<8x128xf32>
    %181 = arith.addf %180, %179 : vector<8x128xf32>
    %182 = arith.divf %180, %181 : vector<8x128xf32>
    %183 = vector.extract_strided_slice %176 {offsets = [0, 128], sizes = [8, 128], strides = [1, 1]} : vector<8x512xf32> to vector<8x128xf32>
    %184 = arith.negf %183 : vector<8x128xf32>
    %185 = math.exp %184 : vector<8x128xf32>
    %cst_55 = arith.constant 1.000000e+00 : f32
    %186 = vector.broadcast %cst_55 : f32 to vector<8x128xf32>
    %187 = arith.addf %186, %185 : vector<8x128xf32>
    %188 = arith.divf %186, %187 : vector<8x128xf32>
    %189 = vector.extract_strided_slice %176 {offsets = [0, 256], sizes = [8, 128], strides = [1, 1]} : vector<8x512xf32> to vector<8x128xf32>
    %190 = math.tanh %189 : vector<8x128xf32>
    %191 = vector.extract_strided_slice %176 {offsets = [0, 384], sizes = [8, 128], strides = [1, 1]} : vector<8x512xf32> to vector<8x128xf32>
    %192 = arith.negf %191 : vector<8x128xf32>
    %193 = math.exp %192 : vector<8x128xf32>
    %cst_56 = arith.constant 1.000000e+00 : f32
    %194 = vector.broadcast %cst_56 : f32 to vector<8x128xf32>
    %195 = arith.addf %194, %193 : vector<8x128xf32>
    %196 = arith.divf %194, %195 : vector<8x128xf32>
    %197 = arith.mulf %188, %170 : vector<8x128xf32>
    %198 = arith.mulf %182, %190 : vector<8x128xf32>
    %199 = arith.addf %197, %198 : vector<8x128xf32>
    %200 = math.tanh %199 : vector<8x128xf32>
    %201 = arith.mulf %196, %200 : vector<8x128xf32>
    %202 = arith.index_cast %c3_i32 : i32 to index
    %c0_57 = arith.constant 0 : index
    %c0_58 = arith.constant 0 : index
    %203 = vector.load %arg6[%202, %c0_57, %c0_58] : memref<4x8x128xf32, #tpu.memory_space<vmem>>, vector<1x8x128xf32>
    %204 = vector.shape_cast %203 : vector<1x8x128xf32> to vector<8x128xf32>
    %205 = vector.shape_cast %201 : vector<8x128xf32> to vector<1x8x128xf32>
    tpu.vector_store %arg6[%202, %c0_57, %c0_58], %205 {strides = array<i32>} : memref<4x8x128xf32, #tpu.memory_space<vmem>>, vector<1x8x128xf32>,
    %c4_i32_59 = arith.constant 4 : i32
    %206 = arith.muli %arg1, %c4_i32_59 : i32
    %207 = arith.addi %206, %c3_i32 : i32
    %c10_i32_60 = arith.constant 10 : i32
    %208 = arith.cmpi slt, %207, %c10_i32_60 : i32
    %209 = arith.extui %208 : i1 to i32
    %210 = arith.sitofp %209 : i32 to f32
    %211 = vector.broadcast %210 : f32 to vector<8x128xf32>
    %212 = arith.mulf %211, %201 : vector<8x128xf32>
    %cst_61 = arith.constant 1.000000e+00 : f32
    %213 = arith.subf %cst_61, %210 : f32
    %214 = vector.broadcast %213 : f32 to vector<8x128xf32>
    %215 = arith.mulf %214, %164 : vector<8x128xf32>
    %216 = arith.addf %212, %215 : vector<8x128xf32>
    %217 = vector.broadcast %210 : f32 to vector<8x128xf32>
    %218 = arith.mulf %217, %199 : vector<8x128xf32>
    %cst_62 = arith.constant 1.000000e+00 : f32
    %219 = arith.subf %cst_62, %210 : f32
    %220 = vector.broadcast %219 : f32 to vector<8x128xf32>
    %221 = arith.mulf %220, %170 : vector<8x128xf32>
    %222 = arith.addf %218, %221 : vector<8x128xf32>
    %c4_i32_63 = arith.constant 4 : i32
    %c0_64 = arith.constant 0 : index
    %c0_65 = arith.constant 0 : index
    %223 = vector.load %arg10[%c0_64, %c0_65] : memref<8x128xf32, #tpu.memory_space<vmem>>, vector<8x128xf32>
    tpu.vector_store %arg10[%c0_64, %c0_65], %216 {strides = array<i32>} : memref<8x128xf32, #tpu.memory_space<vmem>>, vector<8x128xf32>,
    %c0_66 = arith.constant 0 : index
    %c0_67 = arith.constant 0 : index
    %224 = vector.load %arg11[%c0_66, %c0_67] : memref<8x128xf32, #tpu.memory_space<vmem>>, vector<8x128xf32>
    tpu.vector_store %arg11[%c0_66, %c0_67], %222 {strides = array<i32>} : memref<8x128xf32, #tpu.memory_space<vmem>>, vector<8x128xf32>,
    %c2_i32_68 = arith.constant 2 : i32
    %225 = arith.cmpi eq, %arg1, %c2_i32_68 : i32
    %226 = arith.extui %225 : i1 to i32
    %c0_i32_69 = arith.constant 0 : i32
    %227 = arith.cmpi ne, %226, %c0_i32_69 : i32
    scf.if %227 {
      %c0_70 = arith.constant 0 : index
      %c0_71 = arith.constant 0 : index
      %228 = vector.load %arg7[%c0_70, %c0_71] : memref<8x128xf32, #tpu.memory_space<vmem>>, vector<8x128xf32>
      tpu.vector_store %arg7[%c0_70, %c0_71], %216 {strides = array<i32>} : memref<8x128xf32, #tpu.memory_space<vmem>>, vector<8x128xf32>,
      %c0_72 = arith.constant 0 : index
      %c0_73 = arith.constant 0 : index
      %229 = vector.load %arg8[%c0_72, %c0_73] : memref<8x128xf32, #tpu.memory_space<vmem>>, vector<8x128xf32>
      tpu.vector_store %arg8[%c0_72, %c0_73], %222 {strides = array<i32>} : memref<8x128xf32, #tpu.memory_space<vmem>>, vector<8x128xf32>,
    } else {
    }
    return
  }
  func.func @transform_0(%arg0: i32, %arg1: i32) -> (i32, i32, i32) {
    %c0_i32 = arith.constant 0 : i32
    %c0_i32_0 = arith.constant 0 : i32
    return %arg1, %arg0, %c0_i32 : i32, i32, i32
  }
  func.func @transform_1(%arg0: i32, %arg1: i32) -> (i32, i32) {
    %c0_i32 = arith.constant 0 : i32
    %c0_i32_0 = arith.constant 0 : i32
    %c0_i32_1 = arith.constant 0 : i32
    return %c0_i32, %c0_i32_0 : i32, i32
  }
  func.func @transform_2(%arg0: i32, %arg1: i32) -> (i32, i32) {
    %c0_i32 = arith.constant 0 : i32
    %c0_i32_0 = arith.constant 0 : i32
    %c0_i32_1 = arith.constant 0 : i32
    return %c0_i32, %c0_i32_0 : i32, i32
  }
  func.func @transform_3(%arg0: i32, %arg1: i32) -> (i32, i32) {
    %c0_i32 = arith.constant 0 : i32
    %c0_i32_0 = arith.constant 0 : i32
    %c0_i32_1 = arith.constant 0 : i32
    return %c0_i32, %c0_i32_0 : i32, i32
  }
  func.func @transform_4(%arg0: i32, %arg1: i32) -> (i32, i32, i32) {
    %c0_i32 = arith.constant 0 : i32
    %c0_i32_0 = arith.constant 0 : i32
    return %arg1, %arg0, %c0_i32 : i32, i32, i32
  }
  func.func @transform_5(%arg0: i32, %arg1: i32) -> (i32, i32) {
    %c0_i32 = arith.constant 0 : i32
    %c0_i32_0 = arith.constant 0 : i32
    return %arg0, %c0_i32 : i32, i32
  }
  func.func @transform_6(%arg0: i32, %arg1: i32) -> (i32, i32) {
    %c0_i32 = arith.constant 0 : i32
    %c0_i32_0 = arith.constant 0 : i32
    return %arg0, %c0_i32 : i32, i32
  }
}

</mosaic_0001>

<llo_original>
// kernel: tpu_custom_call.1
$region0: #{tpu_custom_call.1}
  #allocation0 [shape = 'u32[]', space=smem, size = 0x4, offset = 0x4, fixed_abs, tag = 'smem constant byte address 0x4 - core index']
  #allocation1 [shape = 'u32[144,128]{1,0:T(1,128)}', space=vmem, size = 0x12000, scoped, tag = 'internal scratch']
  #allocation2 [shape = 'f32[4,8,512]{2,1,0:T(8,128)}', space=vmem, size = 0x10000, scoped, tag = 'scratch operand']
  #allocation3 [shape = 'f32[8,128]{1,0:T(8,128)}', space=vmem, size = 0x1000, scoped, tag = 'scratch operand']
  #allocation4 [shape = 'f32[8,128]{1,0:T(8,128)}', space=vmem, size = 0x1000, scoped, tag = 'scratch operand']
  %s0 = inlined_call_operand.hbm [shape: bf16[12,16,20], index: 0, kind: input, shape index: {}]
  %s1 = inlined_call_operand.hbm [shape: bf16[20,512], index: 1, kind: input, shape index: {}]
  %s2 = inlined_call_operand.hbm [shape: bf16[128,512], index: 2, kind: input, shape index: {}]
  %s3 = inlined_call_operand.vmem [shape: f32[1,512], index: 3, kind: input, shape index: {}]
  %s4 = inlined_call_operand.hbm [shape: f32[12,16,128], index: 4, kind: output, shape index: {0}]
  %s5 = inlined_call_operand.hbm [shape: f32[16,128], index: 5, kind: output, shape index: {1}]
  %s6 = inlined_call_operand.hbm [shape: f32[16,128], index: 6, kind: output, shape index: {2}]
  %7 = xla_tuple %s4, %s5, %s6
  %s8 = sld [smem:[#allocation0]]
  $region85: #{tpu_custom_call.1} parent=0
    _
  %s10 = ssub.s32 1, %s8
  %s11 = scalar_select 0, %s10, %s8
  $region1: #{tpu_custom_call.1} parent=0
    #allocation5 [shape = 'u8[16384]{0}', space=vmem, size = 0x4000, scoped, tag = 'input window, operand 0']
    #allocation6 [shape = 's32[2]{0}', space=sflag, size = 0x8, scoped, tag = 'scoped memory for tpu_custom_call.1']
    #allocation7 [shape = 's32[2]{0}', space=sflag, size = 0x8, scoped, tag = 'scoped memory for tpu_custom_call.1']
    #allocation8 [shape = 'u8[24576]{0}', space=vmem, size = 0x6000, scoped, tag = 'input window, operand 1, single buffered']
    #allocation9 [shape = 's32[1]{0}', space=sflag, size = 0x4, scoped, tag = 'scoped memory for tpu_custom_call.1']
    #allocation10 [shape = 'u8[131072]{0}', space=vmem, size = 0x20000, scoped, tag = 'input window, operand 2, single buffered']
    #allocation11 [shape = 'u8[32768]{0}', space=vmem, size = 0x8000, scoped, tag = 'output window, operand 0']
    #allocation12 [shape = 'u8[8192]{0}', space=vmem, size = 0x2000, scoped, tag = 'output window, operand 1']
    #allocation13 [shape = 's32[2]{0}', space=sflag, size = 0x8, scoped, tag = 'scoped memory for tpu_custom_call.1']
    #allocation14 [shape = 'u8[8192]{0}', space=vmem, size = 0x2000, scoped, tag = 'output window, operand 2']
    %12 = vsyncpa [#allocation6], 0
    %s13 = scalar_lea.sflag [#allocation6], 1
    %14 = vsyncpa %s13, 0
    %15 = vsyncpa [#allocation9], 0
    %16 = vsyncpa [#allocation7], 0
    %s17 = scalar_lea.sflag [#allocation7], 1
    %18 = vsyncpa %s17, 0
    %19 = vsyncpa [#allocation13], 0
    %s20 = scalar_lea.sflag [#allocation13], 1
    %21 = vsyncpa %s20, 0
    loop: start=0, step=1, limit=8
    $region2: #{tpu_custom_call.1} parent=1 // loop_pre_header
      _
    $region3: #{tpu_custom_call.1} parent=1 // loop_header
      %s23 = sphi 0, %s27
      %p24 = scmp.ge.s32.totalorder %s23, 8
      %s30 = sphi 0, %s42
      %s31 = sphi 0, %s38
      %s32 = sphi 0, %s30
      %s33 = sphi 0, %s31
      %s34 = sphi 0, %s32
      %s35 = sphi 0, %s33
      %s47 = sphi 0, %s49
      %s50 = sphi 0, %s47
      %s51 = sphi 0, %s50
      %s67 = sphi 0, %s51
      %s71 = sphi 0, %s71
      %s73 = sphi 0, %s71
      %s74 = sphi 0, %s73
      %s88 = sphi 0, %s74
      %s92 = sphi 0, %s92
      %s94 = sphi 0, %s92
      %s95 = sphi 0, %s94
      %s109 = sphi 0, %s95
      %s113 = sphi 0, %s113
      %s115 = sphi 0, %s113
      %s116 = sphi 0, %s115
      %s130 = sphi 0, %s116
      %s138 = sphi 0, %s140
      %s141 = sphi 0, %s138
      %s142 = sphi 0, %s141
      %s158 = sphi 0, %s142
      %s164 = sphi 0, %s166
      %s167 = sphi 0, %s164
      %s168 = sphi 0, %s167
      %s184 = sphi 0, %s168
      %s190 = sphi 0, %s192
      %s193 = sphi 0, %s190
      %s194 = sphi 0, %s193
      %s210 = sphi 0, %s194
    $region4: #{tpu_custom_call.1} parent=1 // loop_header_branch
      %26 = sbr.rel (%p24) target = $region8
    $region5: #{tpu_custom_call.1} parent=1 // loop_body
      %s28 = ssub.s32 %s23, 1
      %s29 = ssub.s32 %s23, 2
      %s36 = sadd.s32 1, %s31
      %p37 = scmp.ge.s32.totalorder %s36, 3
      %s38 = scalar_select %p37, 0, %s36
      %s39 = sadd.s32 1, %s30
      %s40 = scalar_select %p37, %s39, %s30
      %p41 = scmp.ge.s32.totalorder %s40, 2
      %s42 = scalar_select %p41, 0, %s40
      %s43 = ssub.s32 %s31, %s38
      %s44 = ssub.s32 %s30, %s42
      %s45 = sor.u32 %s43, %s44
      %p46 = scmp.eq.s32.totalorder %s45, 0
      %s48 = sadd.s32 %s47, 1
      %s49 = scalar_select %p46, %s47, %s48
      %p52 = pneg %p46
      %p53 = scmp.eq.s32.totalorder %s23, 5
      %p54 = por %p52, %p53
      %p55 = scmp.ne.s32.totalorder %s47, %s50
      %p56 = scmp.eq.s32.totalorder %s23, 0
      %p57 = por %p55, %p56
      %p58 = scmp.ne.s32.totalorder %s47, %s50
      %p59 = scmp.eq.s32.totalorder %s28, 5
      %p60 = por %p58, %p59
      %p61 = scmp.ne.s32.totalorder %s50, %s51
      %p62 = scmp.eq.s32.totalorder %s28, 0
      %p63 = por %p61, %p62
      %p64 = scmp.ne.s32.totalorder %s50, %s51
      %p65 = scmp.eq.s32.totalorder %s29, 5
      %p66 = por %p64, %p65
      %p68 = scmp.ne.s32.totalorder %s51, %s67
      %p69 = scmp.eq.s32.totalorder %s29, 0
      %p70 = por %p68, %p69
      %s72 = sadd.s32 %s71, 1
      %p75 = scmp.eq.s32.totalorder %s23, 5
      %p76 = scmp.ne.s32.totalorder %s71, %s73
      %p77 = scmp.eq.s32.totalorder %s23, 0
      %p78 = por %p76, %p77
      %p79 = scmp.ne.s32.totalorder %s71, %s73
      %p80 = scmp.eq.s32.totalorder %s28, 5
      %p81 = por %p79, %p80
      %p82 = scmp.ne.s32.totalorder %s73, %s74
      %p83 = scmp.eq.s32.totalorder %s28, 0
      %p84 = por %p82, %p83
      %p85 = scmp.ne.s32.totalorder %s73, %s74
      %p86 = scmp.eq.s32.totalorder %s29, 5
      %p87 = por %p85, %p86
      %p89 = scmp.ne.s32.totalorder %s74, %s88
      %p90 = scmp.eq.s32.totalorder %s29, 0
      %p91 = por %p89, %p90
      %s93 = sadd.s32 %s92, 1
      %p96 = scmp.eq.s32.totalorder %s23, 5
      %p97 = scmp.ne.s32.totalorder %s92, %s94
      %p98 = scmp.eq.s32.totalorder %s23, 0
      %p99 = por %p97, %p98
      %p100 = scmp.ne.s32.totalorder %s92, %s94
      %p101 = scmp.eq.s32.totalorder %s28, 5
      %p102 = por %p100, %p101
      %p103 = scmp.ne.s32.totalorder %s94, %s95
      %p104 = scmp.eq.s32.totalorder %s28, 0
      %p105 = por %p103, %p104
      %p106 = scmp.ne.s32.totalorder %s94, %s95
      %p107 = scmp.eq.s32.totalorder %s29, 5
      %p108 = por %p106, %p107
      %p110 = scmp.ne.s32.totalorder %s95, %s109
      %p111 = scmp.eq.s32.totalorder %s29, 0
      %p112 = por %p110, %p111
      %s114 = sadd.s32 %s113, 1
      %p117 = scmp.eq.s32.totalorder %s23, 5
      %p118 = scmp.ne.s32.totalorder %s113, %s115
      %p119 = scmp.eq.s32.totalorder %s23, 0
      %p120 = por %p118, %p119
      %p121 = scmp.ne.s32.totalorder %s113, %s115
      %p122 = scmp.eq.s32.totalorder %s28, 5
      %p123 = por %p121, %p122
      %p124 = scmp.ne.s32.totalorder %s115, %s116
      %p125 = scmp.eq.s32.totalorder %s28, 0
      %p126 = por %p124, %p125
      %p127 = scmp.ne.s32.totalorder %s115, %s116
      %p128 = scmp.eq.s32.totalorder %s29, 5
      %p129 = por %p127, %p128
      %p131 = scmp.ne.s32.totalorder %s116, %s130
      %p132 = scmp.eq.s32.totalorder %s29, 0
      %p133 = por %p131, %p132
      %s134 = ssub.s32 %s31, %s38
      %s135 = ssub.s32 %s30, %s42
      %s136 = sor.u32 %s134, %s135
      %p137 = scmp.eq.s32.totalorder %s136, 0
      %s139 = sadd.s32 %s138, 1
      %s140 = scalar_select %p137, %s138, %s139
      %p143 = pneg %p137
      %p144 = scmp.eq.s32.totalorder %s23, 5
      %p145 = por %p143, %p144
      %p146 = scmp.ne.s32.totalorder %s138, %s141
      %p147 = scmp.eq.s32.totalorder %s23, 0
      %p148 = por %p146, %p147
      %p149 = scmp.ne.s32.totalorder %s138, %s141
      %p150 = scmp.eq.s32.totalorder %s28, 5
      %p151 = por %p149, %p150
      %p152 = scmp.ne.s32.totalorder %s141, %s142
      %p153 = scmp.eq.s32.totalorder %s28, 0
      %p154 = por %p152, %p153
      %p155 = scmp.ne.s32.totalorder %s141, %s142
      %p156 = scmp.eq.s32.totalorder %s29, 5
      %p157 = por %p155, %p156
      %p159 = scmp.ne.s32.totalorder %s142, %s158
      %p160 = scmp.eq.s32.totalorder %s29, 0
      %p161 = por %p159, %p160
      %s162 = ssub.s32 %s30, %s42
      %p163 = scmp.eq.s32.totalorder %s162, 0
      %s165 = sadd.s32 %s164, 1
      %s166 = scalar_select %p163, %s164, %s165
      %p169 = pneg %p163
      %p170 = scmp.eq.s32.totalorder %s23, 5
      %p171 = por %p169, %p170
      %p172 = scmp.ne.s32.totalorder %s164, %s167
      %p173 = scmp.eq.s32.totalorder %s23, 0
      %p174 = por %p172, %p173
      %p175 = scmp.ne.s32.totalorder %s164, %s167
      %p176 = scmp.eq.s32.totalorder %s28, 5
      %p177 = por %p175, %p176
      %p178 = scmp.ne.s32.totalorder %s167, %s168
      %p179 = scmp.eq.s32.totalorder %s28, 0
      %p180 = por %p178, %p179
      %p181 = scmp.ne.s32.totalorder %s167, %s168
      %p182 = scmp.eq.s32.totalorder %s29, 5
      %p183 = por %p181, %p182
      %p185 = scmp.ne.s32.totalorder %s168, %s184
      %p186 = scmp.eq.s32.totalorder %s29, 0
      %p187 = por %p185, %p186
      %s188 = ssub.s32 %s30, %s42
      %p189 = scmp.eq.s32.totalorder %s188, 0
      %s191 = sadd.s32 %s190, 1
      %s192 = scalar_select %p189, %s190, %s191
      %p195 = pneg %p189
      %p196 = scmp.eq.s32.totalorder %s23, 5
      %p197 = por %p195, %p196
      %p198 = scmp.ne.s32.totalorder %s190, %s193
      %p199 = scmp.eq.s32.totalorder %s23, 0
      %p200 = por %p198, %p199
      %p201 = scmp.ne.s32.totalorder %s190, %s193
      %p202 = scmp.eq.s32.totalorder %s28, 5
      %p203 = por %p201, %p202
      %p204 = scmp.ne.s32.totalorder %s193, %s194
      %p205 = scmp.eq.s32.totalorder %s28, 0
      %p206 = por %p204, %p205
      %p207 = scmp.ne.s32.totalorder %s193, %s194
      %p208 = scmp.eq.s32.totalorder %s29, 5
      %p209 = por %p207, %p208
      %p211 = scmp.ne.s32.totalorder %s194, %s210
      %p212 = scmp.eq.s32.totalorder %s29, 0
      %p213 = por %p211, %p212
      %p214 = scmp.le.s32.totalorder 1, %s23
      %p215 = scmp.lt.s32.totalorder %s23, 7
      %p216 = pnand %p214, %p215
      %p217 = pneg %p216
      // Predicated region
      $region9: #{tpu_custom_call.1} parent=5 // pred_check
        _
      $region10: #{tpu_custom_call.1} parent=5 // pred_check_branch
        %219 = sbr.rel (%p216) target = $region12
      $region11: #{tpu_custom_call.1} parent=5 // pred_region
        %s220 = ssub.s32 %s23, 1
        // Predicated region
        $region13: #{tpu_custom_call.1} parent=11 // pred_check
          %p221 = pneg %p84
        $region14: #{tpu_custom_call.1} parent=11 // pred_check_branch
          %223 = sbr.rel (%p221) target = $region16
        $region15: #{tpu_custom_call.1} parent=11 // pred_region
          %s225 = ssub.s32 768, 768
          %226 = vsyncadd [#allocation9], %s225
          %s227 = sshll.u32 [#allocation8], 4
          %s228 = int_to_ptr.vmem [resolvable:$true] %s227
          %233 = dma.hbm_to_vmem [thread:$0]  %s1, 768, %s228, [#allocation9], 256, 256, 16
        $region16: #{tpu_custom_call.1} parent=11 // pred_fallthru
          _
        // Predicated region
        $region17: #{tpu_custom_call.1} parent=11 // pred_check
          %p234 = pneg %p105
        $region18: #{tpu_custom_call.1} parent=11 // pred_check_branch
          %236 = sbr.rel (%p234) target = $region20
        $region19: #{tpu_custom_call.1} parent=11 // pred_region
          %s238 = ssub.s32 4096, 4096
          %239 = vsyncadd [#allocation9], %s238
          %s240 = sshll.u32 [#allocation10], 4
          %s241 = int_to_ptr.vmem [resolvable:$true] %s240
          %246 = dma.hbm_to_vmem [thread:$0]  %s2, 4096, %s241, [#allocation9], 256, 256, 16
        $region20: #{tpu_custom_call.1} parent=11 // pred_fallthru
          _
        // Predicated region
        $region21: #{tpu_custom_call.1} parent=11 // pred_check
          %p247 = pneg %p126
        $region22: #{tpu_custom_call.1} parent=11 // pred_check_branch
          %249 = sbr.rel (%p247) target = $region24
        $region23: #{tpu_custom_call.1} parent=11 // pred_region
          _
        $region24: #{tpu_custom_call.1} parent=11 // pred_fallthru
          _
      $region12: #{tpu_custom_call.1} parent=5 // pred_fallthru
        _
      %p250 = scmp.lt.s32.totalorder %s23, 6
      // Predicated region
      $region25: #{tpu_custom_call.1} parent=5 // pred_check
        %p251 = pneg %p250
      $region26: #{tpu_custom_call.1} parent=5 // pred_check_branch
        %253 = sbr.rel (%p251) target = $region28
      $region27: #{tpu_custom_call.1} parent=5 // pred_region
        // Predicated region
        $region29: #{tpu_custom_call.1} parent=27 // pred_check
          %p254 = pneg %p57
        $region30: #{tpu_custom_call.1} parent=27 // pred_check_branch
          %256 = sbr.rel (%p254) target = $region32
        $region31: #{tpu_custom_call.1} parent=27 // pred_region
          %s257 = sand.u32 %s47, 1
          %s258 = scalar_lea.sflag [#allocation6], %s257
          %s259 = sand.u32 %s47, 1
          %s260 = smul.addr %s259, 16
          %s261 = scalar_lea.vmem [#allocation5], %s260
          %s262 = smul.u32 4, %s31
          %s264 = ssub.s32 256, 256
          %265 = vsyncadd %s258, %s264
          %s266 = smul.addr %s262, 2
          %s267 = sadd.s32 %s30, %s266
          %s268 = smul.addr %s267, 64
          %s269 = scalar_lea.hbm %s0, %s268
          %s270 = sshll.u32 %s261, 4
          %s271 = int_to_ptr.vmem [resolvable:$true] %s270
          %276 = dma.hbm_to_vmem [thread:$0]  %s269, 256, %s271, %s258, 128, 64, 4
        $region32: #{tpu_custom_call.1} parent=27 // pred_fallthru
          _
      $region28: #{tpu_custom_call.1} parent=5 // pred_fallthru
        _
      %p277 = scmp.le.s32.totalorder 1, %s23
      %p278 = scmp.lt.s32.totalorder %s23, 7
      %p279 = pnand %p277, %p278
      %p280 = pneg %p279
      // Predicated region
      $region33: #{tpu_custom_call.1} parent=5 // pred_check
        _
      $region34: #{tpu_custom_call.1} parent=5 // pred_check_branch
        %282 = sbr.rel (%p279) target = $region36
      $region35: #{tpu_custom_call.1} parent=5 // pred_region
        %s283 = ssub.s32 %s23, 1
        %s284 = sand.u32 %s50, 1
        %s285 = scalar_lea.sflag [#allocation6], %s284
        %s286 = sand.u32 %s50, 1
        %s287 = smul.addr %s286, 16
        %s288 = scalar_lea.vmem [#allocation5], %s287
        // Predicated region
        $region37: #{tpu_custom_call.1} parent=35 // pred_check
          %p289 = pneg %p63
        $region38: #{tpu_custom_call.1} parent=35 // pred_check_branch
          %291 = sbr.rel (%p289) target = $region40
        $region39: #{tpu_custom_call.1} parent=35 // pred_region
          %292 = dma.done %s285, 256
        $region40: #{tpu_custom_call.1} parent=35 // pred_fallthru
          _
        // Predicated region
        $region41: #{tpu_custom_call.1} parent=35 // pred_check
          %p293 = pneg %p84
        $region42: #{tpu_custom_call.1} parent=35 // pred_check_branch
          %295 = sbr.rel (%p293) target = $region44
        $region43: #{tpu_custom_call.1} parent=35 // pred_region
          %296 = dma.done [#allocation9], 768
        $region44: #{tpu_custom_call.1} parent=35 // pred_fallthru
          _
        // Predicated region
        $region45: #{tpu_custom_call.1} parent=35 // pred_check
          %p297 = pneg %p105
        $region46: #{tpu_custom_call.1} parent=35 // pred_check_branch
          %299 = sbr.rel (%p297) target = $region48
        $region47: #{tpu_custom_call.1} parent=35 // pred_region
          %300 = dma.done [#allocation9], 4096
        $region48: #{tpu_custom_call.1} parent=35 // pred_fallthru
          _
        %s301 = sand.u32 %s50, 1
        %s302 = scalar_lea.sflag [#allocation6], %s301
        %s303 = sand.u32 %s50, 1
        %s304 = smul.addr %s303, 16
        %s305 = scalar_lea.vmem [#allocation5], %s304
        %p306 = pneg %p63
        %p307 = pneg %p60
        %p308 = pneg %p84
        %p309 = pneg %p81
        %p310 = pneg %p105
        %p311 = pneg %p102
        %p312 = pneg %p126
        %p313 = pneg %p123
        %p314 = pneg %p154
        %p315 = pneg %p151
        %s316 = sand.u32 %s141, 1
        %s317 = scalar_lea.sflag [#allocation7], %s316
        %s318 = sand.u32 %s141, 1
        %s319 = smul.addr %s318, 32
        %s320 = scalar_lea.vmem [#allocation11], %s319
        %p321 = pneg %p180
        %p322 = pneg %p177
        %s323 = sand.u32 %s28, 1
        %s324 = scalar_lea.sflag [#allocation13], %s323
        %s325 = sand.u32 %s167, 1
        %s326 = smul.addr %s325, 8
        %s327 = scalar_lea.vmem [#allocation12], %s326
        %p328 = pneg %p206
        %p329 = pneg %p203
        %s330 = sand.u32 %s28, 1
        %s331 = scalar_lea.sflag [#allocation13], %s330
        %s332 = sand.u32 %s193, 1
        %s333 = smul.addr %s332, 8
        %s334 = scalar_lea.vmem [#allocation14], %s333
        %s335 = smul.u32 4, %s33
        %s336 = smul.u32 4, %s33
        %p338 = scmp.eq.s32.totalorder %s33, 0
        // Predicated region
        $region49: #{tpu_custom_call.1} parent=35 // pred_check
          %p339 = pneg %p338
        $region50: #{tpu_custom_call.1} parent=35 // pred_check_branch
          %341 = sbr.rel (%p339) target = $region52
        $region51: #{tpu_custom_call.1} parent=35 // pred_region
          %342 = vst [vmem:[#allocation3] sm:$0xff] 0.0
          %343 = vst [vmem:[#allocation4] sm:$0xff] 0.0
        $region52: #{tpu_custom_call.1} parent=35 // pred_fallthru
          _
        %v344 = vld [vmem:[%s288] sm:$0xf]
        %v345 = vld [vmem:[%s288 + $0x4] sm:$0xf]
        %v346 = vld [vmem:[%s288 + $0x8] sm:$0xf]
        %v347 = vld [vmem:[%s288 + $0xc] sm:$0xf]
        %v348 = vld [vmem:[#allocation8] sm:$0xff]
        %v349 = vld [vmem:[#allocation8 + $0x8] sm:$0xff]
        %v350 = vld [vmem:[#allocation8 + $0x10] sm:$0xff]
        %v351 = vld [vmem:[#allocation8 + $0x18] sm:$0xff]
        %v352 = vld [vmem:[#allocation8 + $0x20] sm:$0x33]
        %v353 = vld [vmem:[#allocation8 + $0x28] sm:$0x33]
        %v354 = vld [vmem:[%s3] sm:$0xf]
        %v356 = vlaneseq
        %v357 = vshrl.u32 %v356, 7
        %v358 = vsub.s32 0, %v357
        %v359 = vrot.slane %v354, %v358
        %v360 = vlaneseq
        %v361 = vshrl.u32 %v360, 7
        %v362 = vsub.s32 1, %v361
        %v363 = vrot.slane %v354, %v362
        %v364 = vlaneseq
        %v365 = vshrl.u32 %v364, 7
        %v366 = vsub.s32 2, %v365
        %v367 = vrot.slane %v354, %v366
        %v368 = vlaneseq
        %v369 = vshrl.u32 %v368, 7
        %v370 = vsub.s32 3, %v369
        %v371 = vrot.slane %v354, %v370
        %v380 = vunpack.c.l.b16 %v344
        %v381 = vunpack.c.l.b16 %v345
        %v382 = vunpack.c.l.b16 %v346
        %v383 = vunpack.c.l.b16 %v347
        %v384 = vpack.c.b16 %v381, %v380
        %v385 = vpack.c.b16 %v383, %v382
        %v392 = vunpack.c.l.b16 %v348
        %v393 = vunpack.c.h.b16 %v348
        %v394 = vunpack.c.l.b16 %v349
        %v395 = vunpack.c.h.b16 %v349
        %v396 = vunpack.c.l.b16 %v350
        %v397 = vunpack.c.h.b16 %v350
        %v398 = vunpack.c.l.b16 %v351
        %v399 = vunpack.c.h.b16 %v351
        %v400 = vunpack.c.l.b16 %v352
        %v401 = vunpack.c.h.b16 %v352
        %v402 = vunpack.c.l.b16 %v353
        %v403 = vunpack.c.h.b16 %v353
        %v404 = vpack.c.b16 %v396, %v392
        %v405 = vpack.c.b16 %v397, %v393
        %v406 = vpack.c.b16 %v398, %v394
        %v407 = vpack.c.b16 %v399, %v395
        %v408 = vpack.c.b16 %v400, %v400
        %v409 = vpack.c.b16 %v401, %v401
        %v410 = vpack.c.b16 %v402, %v402
        %v411 = vpack.c.b16 %v403, %v403
        %vm416 = vcmask 162816
        %v418 = vsel %vm416, %v384, 0
        %v421 = vsel %vm416, %v385, 0
        %vm423 = vcmask 1041408
        %v425 = vsel %vm423, %v408, 0
        %v428 = vsel %vm423, %v409, 0
        %v431 = vsel %vm423, %v410, 0
        %v434 = vsel %vm423, %v411, 0
        %436 = vmatprep.subr.bf16.mxu0 %v405
        %437 = vmatpush1.bf16.msra.mxu0 %v404
        %438 = vmatprep.subr.bf16.mxu0 %v428
        %439 = vmatpush1.bf16.msra.mxu0 %v425
        %440 = vmatprep.subr.bf16.mxu0 0
        %441 = vmatpush1.bf16.msra.mxu0 0
        %442 = vmatprep.subr.bf16.mxu0 0
        %443 = vmatpush1.bf16.msra.mxu0 0
        %444 = vmatprep.subr.bf16.mxu0 0
        %445 = vmatpush1.bf16.msra.mxu0 0
        %446 = vmatprep.subr.bf16.mxu0 0
        %447 = vmatpush1.bf16.msra.mxu0 0
        %448 = vmatprep.subr.bf16.mxu0 0
        %449 = vmatpush1.bf16.msra.mxu0 0
        %450 = vmatprep.subr.bf16.mxu0 0
        %451 = vmatpush1.bf16.msra.mxu0 0
        %452 = vmatprep.subr.bf16.mxu0 0
        %453 = vmatpush1.bf16.msra.mxu0 0
        %454 = vmatprep.subr.bf16.mxu0 0
        %455 = vmatpush1.bf16.msra.mxu0 0
        %456 = vmatprep.subr.bf16.mxu0 0
        %457 = vmatpush1.bf16.msra.mxu0 0
        %458 = vmatprep.subr.bf16.mxu0 0
        %459 = vmatpush1.bf16.msra.mxu0 0
        %460 = vmatprep.subr.bf16.mxu0 0
        %461 = vmatpush1.bf16.msra.mxu0 0
        %462 = vmatprep.subr.bf16.mxu0 0
        %463 = vmatpush1.bf16.msra.mxu0 0
        %464 = vmatprep.subr.bf16.mxu0 0
        %465 = vmatpush1.bf16.msra.mxu0 0
        %466 = vmatprep.subr.bf16.mxu0 0
        %467 = vmatpush1.bf16.msra.mxu0 0
        %468 = vmatprep.mubr.bf16.mxu0 0
        %469 = vmatmul.mubr.bf16.gmra.mrb[0].mxu0 %v418
        %v470 = vpop.f32.mrb[0].mxu0
        %v471 = vadd.f32 %v359, %v470
        %v472 = vpop.f32.mrb[0].mxu0
        %v473 = vadd.f32 %v363, %v472
        %v474 = vpop.f32.mrb[0].mxu0
        %v475 = vadd.f32 %v359, %v474
        %v476 = vpop.f32.mrb[0].mxu0
        %v477 = vadd.f32 %v363, %v476
        %478 = vmatprep.mubr.bf16.mxu0 0
        %479 = vmatmul.mubr.bf16.gmra.mrb[0].mxu0 %v421
        %v480 = vpop.f32.mrb[0].mxu0
        %v481 = vadd.f32 %v359, %v480
        %v482 = vpop.f32.mrb[0].mxu0
        %v483 = vadd.f32 %v363, %v482
        %v484 = vpop.f32.mrb[0].mxu0
        %v485 = vadd.f32 %v359, %v484
        %v486 = vpop.f32.mrb[0].mxu0
        %v487 = vadd.f32 %v363, %v486
        %488 = vdwg.mxu0
        %489 = vmatprep.subr.bf16.mxu0 %v407
        %490 = vmatpush1.bf16.msra.mxu0 %v406
        %491 = vmatprep.subr.bf16.mxu0 %v434
        %492 = vmatpush1.bf16.msra.mxu0 %v431
        %493 = vmatprep.subr.bf16.mxu0 0
        %494 = vmatpush1.bf16.msra.mxu0 0
        %495 = vmatprep.subr.bf16.mxu0 0
        %496 = vmatpush1.bf16.msra.mxu0 0
        %497 = vmatprep.subr.bf16.mxu0 0
        %498 = vmatpush1.bf16.msra.mxu0 0
        %499 = vmatprep.subr.bf16.mxu0 0
        %500 = vmatpush1.bf16.msra.mxu0 0
        %501 = vmatprep.subr.bf16.mxu0 0
        %502 = vmatpush1.bf16.msra.mxu0 0
        %503 = vmatprep.subr.bf16.mxu0 0
        %504 = vmatpush1.bf16.msra.mxu0 0
        %505 = vmatprep.subr.bf16.mxu0 0
        %506 = vmatpush1.bf16.msra.mxu0 0
        %507 = vmatprep.subr.bf16.mxu0 0
        %508 = vmatpush1.bf16.msra.mxu0 0
        %509 = vmatprep.subr.bf16.mxu0 0
        %510 = vmatpush1.bf16.msra.mxu0 0
        %511 = vmatprep.subr.bf16.mxu0 0
        %512 = vmatpush1.bf16.msra.mxu0 0
        %513 = vmatprep.subr.bf16.mxu0 0
        %514 = vmatpush1.bf16.msra.mxu0 0
        %515 = vmatprep.subr.bf16.mxu0 0
        %516 = vmatpush1.bf16.msra.mxu0 0
        %517 = vmatprep.subr.bf16.mxu0 0
        %518 = vmatpush1.bf16.msra.mxu0 0
        %519 = vmatprep.subr.bf16.mxu0 0
        %520 = vmatpush1.bf16.msra.mxu0 0
        %521 = vmatprep.mubr.bf16.mxu0 0
        %522 = vmatmul.mubr.bf16.gmra.mrb[0].mxu0 %v418
        %v523 = vpop.f32.mrb[0].mxu0
        %v524 = vadd.f32 %v367, %v523
        %v525 = vpop.f32.mrb[0].mxu0
        %v526 = vadd.f32 %v371, %v525
        %v527 = vpop.f32.mrb[0].mxu0
        %v528 = vadd.f32 %v367, %v527
        %v529 = vpop.f32.mrb[0].mxu0
        %v530 = vadd.f32 %v371, %v529
        %531 = vmatprep.mubr.bf16.mxu0 0
        %532 = vmatmul.mubr.bf16.gmra.mrb[0].mxu0 %v421
        %v533 = vpop.f32.mrb[0].mxu0
        %v534 = vadd.f32 %v367, %v533
        %v535 = vpop.f32.mrb[0].mxu0
        %v536 = vadd.f32 %v371, %v535
        %v537 = vpop.f32.mrb[0].mxu0
        %v538 = vadd.f32 %v367, %v537
        %v539 = vpop.f32.mrb[0].mxu0
        %v540 = vadd.f32 %v371, %v539
        %541 = vdwg.mxu0
        %542 = vst [vmem:[#allocation2] sm:$0xff] %v471
        %543 = vst [vmem:[#allocation2 + $0x8] sm:$0xff] %v473
        %544 = vst [vmem:[#allocation2 + $0x10] sm:$0xff] %v524
        %545 = vst [vmem:[#allocation2 + $0x18] sm:$0xff] %v526
        %546 = vst [vmem:[#allocation2 + $0x20] sm:$0xff] %v475
        %547 = vst [vmem:[#allocation2 + $0x28] sm:$0xff] %v477
        %548 = vst [vmem:[#allocation2 + $0x30] sm:$0xff] %v528
        %549 = vst [vmem:[#allocation2 + $0x38] sm:$0xff] %v530
        %550 = vst [vmem:[#allocation2 + $0x40] sm:$0xff] %v481
        %551 = vst [vmem:[#allocation2 + $0x48] sm:$0xff] %v483
        %552 = vst [vmem:[#allocation2 + $0x50] sm:$0xff] %v534
        %553 = vst [vmem:[#allocation2 + $0x58] sm:$0xff] %v536
        %554 = vst [vmem:[#allocation2 + $0x60] sm:$0xff] %v485
        %555 = vst [vmem:[#allocation2 + $0x68] sm:$0xff] %v487
        %556 = vst [vmem:[#allocation2 + $0x70] sm:$0xff] %v538
        %557 = vst [vmem:[#allocation2 + $0x78] sm:$0xff] %v540
        %v558 = vld [vmem:[#allocation10] sm:$0xff]
        %v559 = vld [vmem:[#allocation10 + $0x8] sm:$0xff]
        %v560 = vld [vmem:[#allocation10 + $0x10] sm:$0xff]
        %v561 = vld [vmem:[#allocation10 + $0x18] sm:$0xff]
        %v562 = vld [vmem:[#allocation10 + $0x20] sm:$0xff]
        %v563 = vld [vmem:[#allocation10 + $0x28] sm:$0xff]
        %v564 = vld [vmem:[#allocation10 + $0x30] sm:$0xff]
        %v565 = vld [vmem:[#allocation10 + $0x38] sm:$0xff]
        %v566 = vld [vmem:[#allocation10 + $0x40] sm:$0xff]
        %v567 = vld [vmem:[#allocation10 + $0x48] sm:$0xff]
        %v568 = vld [vmem:[#allocation10 + $0x50] sm:$0xff]
        %v569 = vld [vmem:[#allocation10 + $0x58] sm:$0xff]
        %v570 = vld [vmem:[#allocation10 + $0x60] sm:$0xff]
        %v571 = vld [vmem:[#allocation10 + $0x68] sm:$0xff]
        %v572 = vld [vmem:[#allocation10 + $0x70] sm:$0xff]
        %v573 = vld [vmem:[#allocation10 + $0x78] sm:$0xff]
        %v574 = vld [vmem:[#allocation10 + $0x80] sm:$0xff]
        %v575 = vld [vmem:[#allocation10 + $0x88] sm:$0xff]
        %v576 = vld [vmem:[#allocation10 + $0x90] sm:$0xff]
        %v577 = vld [vmem:[#allocation10 + $0x98] sm:$0xff]
        %v578 = vld [vmem:[#allocation10 + $0xa0] sm:$0xff]
        %v579 = vld [vmem:[#allocation10 + $0xa8] sm:$0xff]
        %v580 = vld [vmem:[#allocation10 + $0xb0] sm:$0xff]
        %v581 = vld [vmem:[#allocation10 + $0xb8] sm:$0xff]
        %v582 = vld [vmem:[#allocation10 + $0xc0] sm:$0xff]
        %v583 = vld [vmem:[#allocation10 + $0xc8] sm:$0xff]
        %v584 = vld [vmem:[#allocation10 + $0xd0] sm:$0xff]
        %v585 = vld [vmem:[#allocation10 + $0xd8] sm:$0xff]
        %v586 = vld [vmem:[#allocation10 + $0xe0] sm:$0xff]
        %v587 = vld [vmem:[#allocation10 + $0xe8] sm:$0xff]
        %v588 = vld [vmem:[#allocation10 + $0xf0] sm:$0xff]
        %v589 = vld [vmem:[#allocation10 + $0xf8] sm:$0xff]
        %v590 = vld [vmem:[#allocation3] sm:$0xff]
        %v591 = vld [vmem:[#allocation4] sm:$0xff]
        %v592 = vld [vmem:[#allocation2] sm:$0xff]
        %v593 = vld [vmem:[#allocation2 + $0x8] sm:$0xff]
        %v594 = vld [vmem:[#allocation2 + $0x10] sm:$0xff]
        %v595 = vld [vmem:[#allocation2 + $0x18] sm:$0xff]
        %v596 = vpack.c.bf16 %v590, %v590
        %v629 = vunpack.c.l.b16 %v558
        %v630 = vunpack.c.h.b16 %v558
        %v631 = vunpack.c.l.b16 %v559
        %v632 = vunpack.c.h.b16 %v559
        %v633 = vunpack.c.l.b16 %v560
        %v634 = vunpack.c.h.b16 %v560
        %v635 = vunpack.c.l.b16 %v561
        %v636 = vunpack.c.h.b16 %v561
        %v637 = vunpack.c.l.b16 %v562
        %v638 = vunpack.c.h.b16 %v562
        %v639 = vunpack.c.l.b16 %v563
        %v640 = vunpack.c.h.b16 %v563
        %v641 = vunpack.c.l.b16 %v564
        %v642 = vunpack.c.h.b16 %v564
        %v643 = vunpack.c.l.b16 %v565
        %v644 = vunpack.c.h.b16 %v565
        %v645 = vunpack.c.l.b16 %v566
        %v646 = vunpack.c.h.b16 %v566
        %v647 = vunpack.c.l.b16 %v567
        %v648 = vunpack.c.h.b16 %v567
        %v649 = vunpack.c.l.b16 %v568
        %v650 = vunpack.c.h.b16 %v568
        %v651 = vunpack.c.l.b16 %v569
        %v652 = vunpack.c.h.b16 %v569
        %v653 = vunpack.c.l.b16 %v570
        %v654 = vunpack.c.h.b16 %v570
        %v655 = vunpack.c.l.b16 %v571
        %v656 = vunpack.c.h.b16 %v571
        %v657 = vunpack.c.l.b16 %v572
        %v658 = vunpack.c.h.b16 %v572
        %v659 = vunpack.c.l.b16 %v573
        %v660 = vunpack.c.h.b16 %v573
        %v661 = vunpack.c.l.b16 %v574
        %v662 = vunpack.c.h.b16 %v574
        %v663 = vunpack.c.l.b16 %v575
        %v664 = vunpack.c.h.b16 %v575
        %v665 = vunpack.c.l.b16 %v576
        %v666 = vunpack.c.h.b16 %v576
        %v667 = vunpack.c.l.b16 %v577
        %v668 = vunpack.c.h.b16 %v577
        %v669 = vunpack.c.l.b16 %v578
        %v670 = vunpack.c.h.b16 %v578
        %v671 = vunpack.c.l.b16 %v579
        %v672 = vunpack.c.h.b16 %v579
        %v673 = vunpack.c.l.b16 %v580
        %v674 = vunpack.c.h.b16 %v580
        %v675 = vunpack.c.l.b16 %v581
        %v676 = vunpack.c.h.b16 %v581
        %v677 = vunpack.c.l.b16 %v582
        %v678 = vunpack.c.h.b16 %v582
        %v679 = vunpack.c.l.b16 %v583
        %v680 = vunpack.c.h.b16 %v583
        %v681 = vunpack.c.l.b16 %v584
        %v682 = vunpack.c.h.b16 %v584
        %v683 = vunpack.c.l.b16 %v585
        %v684 = vunpack.c.h.b16 %v585
        %v685 = vunpack.c.l.b16 %v586
        %v686 = vunpack.c.h.b16 %v586
        %v687 = vunpack.c.l.b16 %v587
        %v688 = vunpack.c.h.b16 %v587
        %v689 = vunpack.c.l.b16 %v588
        %v690 = vunpack.c.h.b16 %v588
        %v691 = vunpack.c.l.b16 %v589
        %v692 = vunpack.c.h.b16 %v589
        %v693 = vpack.c.b16 %v633, %v629
        %v694 = vpack.c.b16 %v634, %v630
        %v695 = vpack.c.b16 %v635, %v631
        %v696 = vpack.c.b16 %v636, %v632
        %v697 = vpack.c.b16 %v641, %v637
        %v698 = vpack.c.b16 %v642, %v638
        %v699 = vpack.c.b16 %v643, %v639
        %v700 = vpack.c.b16 %v644, %v640
        %v701 = vpack.c.b16 %v649, %v645
        %v702 = vpack.c.b16 %v650, %v646
        %v703 = vpack.c.b16 %v651, %v647
        %v704 = vpack.c.b16 %v652, %v648
        %v705 = vpack.c.b16 %v657, %v653
        %v706 = vpack.c.b16 %v658, %v654
        %v707 = vpack.c.b16 %v659, %v655
        %v708 = vpack.c.b16 %v660, %v656
        %v709 = vpack.c.b16 %v665, %v661
        %v710 = vpack.c.b16 %v666, %v662
        %v711 = vpack.c.b16 %v667, %v663
        %v712 = vpack.c.b16 %v668, %v664
        %v713 = vpack.c.b16 %v673, %v669
        %v714 = vpack.c.b16 %v674, %v670
        %v715 = vpack.c.b16 %v675, %v671
        %v716 = vpack.c.b16 %v676, %v672
        %v717 = vpack.c.b16 %v681, %v677
        %v718 = vpack.c.b16 %v682, %v678
        %v719 = vpack.c.b16 %v683, %v679
        %v720 = vpack.c.b16 %v684, %v680
        %v721 = vpack.c.b16 %v689, %v685
        %v722 = vpack.c.b16 %v690, %v686
        %v723 = vpack.c.b16 %v691, %v687
        %v724 = vpack.c.b16 %v692, %v688
        %757 = vmatprep.subr.bf16.mxu0 %v694
        %758 = vmatpush1.bf16.msra.mxu0 %v693
        %759 = vmatprep.subr.bf16.mxu0 %v698
        %760 = vmatpush1.bf16.msra.mxu0 %v697
        %761 = vmatprep.subr.bf16.mxu0 %v702
        %762 = vmatpush1.bf16.msra.mxu0 %v701
        %763 = vmatprep.subr.bf16.mxu0 %v706
        %764 = vmatpush1.bf16.msra.mxu0 %v705
        %765 = vmatprep.subr.bf16.mxu0 %v710
        %766 = vmatpush1.bf16.msra.mxu0 %v709
        %767 = vmatprep.subr.bf16.mxu0 %v714
        %768 = vmatpush1.bf16.msra.mxu0 %v713
        %769 = vmatprep.subr.bf16.mxu0 %v718
        %770 = vmatpush1.bf16.msra.mxu0 %v717
        %771 = vmatprep.subr.bf16.mxu0 %v722
        %772 = vmatpush1.bf16.msra.mxu0 %v721
        %773 = vmatprep.subr.bf16.mxu0 0
        %774 = vmatpush1.bf16.msra.mxu0 0
        %775 = vmatprep.subr.bf16.mxu0 0
        %776 = vmatpush1.bf16.msra.mxu0 0
        %777 = vmatprep.subr.bf16.mxu0 0
        %778 = vmatpush1.bf16.msra.mxu0 0
        %779 = vmatprep.subr.bf16.mxu0 0
        %780 = vmatpush1.bf16.msra.mxu0 0
        %781 = vmatprep.subr.bf16.mxu0 0
        %782 = vmatpush1.bf16.msra.mxu0 0
        %783 = vmatprep.subr.bf16.mxu0 0
        %784 = vmatpush1.bf16.msra.mxu0 0
        %785 = vmatprep.subr.bf16.mxu0 0
        %786 = vmatpush1.bf16.msra.mxu0 0
        %787 = vmatprep.subr.bf16.mxu0 0
        %788 = vmatpush1.bf16.msra.mxu0 0
        %789 = vmatprep.mubr.bf16.mxu0 0
        %790 = vmatmul.mubr.bf16.gmra.mrb[0].mxu0 %v596
        %v791 = vpop.f32.mrb[0].mxu0
        %v792 = vadd.f32 0.0, %v791
        %v793 = vpop.f32.mrb[0].mxu0
        %v794 = vadd.f32 0.0, %v793
        %v795 = vpop.f32.mrb[0].mxu0
        %v796 = vpop.f32.mrb[0].mxu0
        %797 = vdwg.mxu0
        %798 = vmatprep.subr.bf16.mxu0 %v696
        %799 = vmatpush1.bf16.msra.mxu0 %v695
        %800 = vmatprep.subr.bf16.mxu0 %v700
        %801 = vmatpush1.bf16.msra.mxu0 %v699
        %802 = vmatprep.subr.bf16.mxu0 %v704
        %803 = vmatpush1.bf16.msra.mxu0 %v703
        %804 = vmatprep.subr.bf16.mxu0 %v708
        %805 = vmatpush1.bf16.msra.mxu0 %v707
        %806 = vmatprep.subr.bf16.mxu0 %v712
        %807 = vmatpush1.bf16.msra.mxu0 %v711
        %808 = vmatprep.subr.bf16.mxu0 %v716
        %809 = vmatpush1.bf16.msra.mxu0 %v715
        %810 = vmatprep.subr.bf16.mxu0 %v720
        %811 = vmatpush1.bf16.msra.mxu0 %v719
        %812 = vmatprep.subr.bf16.mxu0 %v724
        %813 = vmatpush1.bf16.msra.mxu0 %v723
        %814 = vmatprep.subr.bf16.mxu0 0
        %815 = vmatpush1.bf16.msra.mxu0 0
        %816 = vmatprep.subr.bf16.mxu0 0
        %817 = vmatpush1.bf16.msra.mxu0 0
        %818 = vmatprep.subr.bf16.mxu0 0
        %819 = vmatpush1.bf16.msra.mxu0 0
        %820 = vmatprep.subr.bf16.mxu0 0
        %821 = vmatpush1.bf16.msra.mxu0 0
        %822 = vmatprep.subr.bf16.mxu0 0
        %823 = vmatpush1.bf16.msra.mxu0 0
        %824 = vmatprep.subr.bf16.mxu0 0
        %825 = vmatpush1.bf16.msra.mxu0 0
        %826 = vmatprep.subr.bf16.mxu0 0
        %827 = vmatpush1.bf16.msra.mxu0 0
        %828 = vmatprep.subr.bf16.mxu0 0
        %829 = vmatpush1.bf16.msra.mxu0 0
        %830 = vmatprep.mubr.bf16.mxu0 0
        %831 = vmatmul.mubr.bf16.gmra.mrb[0].mxu0 %v596
        %v832 = vpop.f32.mrb[0].mxu0
        %v833 = vadd.f32 0.0, %v832
        %v834 = vpop.f32.mrb[0].mxu0
        %v835 = vadd.f32 0.0, %v834
        %v836 = vpop.f32.mrb[0].mxu0
        %v837 = vpop.f32.mrb[0].mxu0
        %838 = vdwg.mxu0
        %v839 = vadd.f32 %v592, %v792
        %v840 = vadd.f32 %v593, %v794
        %v841 = vadd.f32 %v594, %v833
        %v842 = vadd.f32 %v595, %v835
        %v843 = vxor.u32 %v839, 2147483648
        %v844 = vmul.f32 %v843, 1.442695
        %v845 = vpow.pop %v844
        %v846 = vadd.f32 %v845, 1.0
        %v847 = vrcp.pop %v846
        %v848 = vmul.f32 1.0, %v847
        %v849 = vxor.u32 %v840, 2147483648
        %v850 = vmul.f32 %v849, 1.442695
        %v851 = vpow.pop %v850
        %v852 = vadd.f32 %v851, 1.0
        %v853 = vrcp.pop %v852
        %v854 = vmul.f32 1.0, %v853
        %v855 = vtanh.pop %v841
        %v856 = vxor.u32 %v842, 2147483648
        %v857 = vmul.f32 %v856, 1.442695
        %v858 = vpow.pop %v857
        %v859 = vadd.f32 %v858, 1.0
        %v860 = vrcp.pop %v859
        %v861 = vmul.f32 1.0, %v860
        %v862 = vmul.f32 %v854, %v591
        %v863 = vmul.f32 %v848, %v855
        %v864 = vadd.f32 %v862, %v863
        %v865 = vtanh.pop %v864
        %v866 = vmul.f32 %v861, %v865
        %867 = vst [vmem:[%s320] sm:$0xff] %v866
        %s868 = smul.u32 %s33, 4
        %p869 = scmp.lt.s32.totalorder %s868, 10
        %s870 = scalar_select %p869, 1, 0
        %s871 = scvt.s32.f32 %s870
        %v872 = vstv %s871
        %v873 = vmul.f32 %v872, %v866
        %s874 = ssub.f32 1.0, %s871
        %v875 = vstv %s874
        %v876 = vmul.f32 %v875, %v590
        %v877 = vadd.f32 %v873, %v876
        %v878 = vmul.f32 %v872, %v864
        %v879 = vmul.f32 %v875, %v591
        %v880 = vadd.f32 %v878, %v879
        %s881 = scalar_lea.vmem [#allocation2], 32
        %v882 = vld [vmem:[%s881] sm:$0xff]
        %v883 = vld [vmem:[%s881 + $0x8] sm:$0xff]
        %v884 = vld [vmem:[%s881 + $0x10] sm:$0xff]
        %v885 = vld [vmem:[%s881 + $0x18] sm:$0xff]
        %v886 = vpack.c.bf16 %v877, %v877
        %887 = vmatprep.subr.bf16.mxu0 %v694
        %888 = vmatpush1.bf16.msra.mxu0 %v693
        %889 = vmatprep.subr.bf16.mxu0 %v698
        %890 = vmatpush1.bf16.msra.mxu0 %v697
        %891 = vmatprep.subr.bf16.mxu0 %v702
        %892 = vmatpush1.bf16.msra.mxu0 %v701
        %893 = vmatprep.subr.bf16.mxu0 %v706
        %894 = vmatpush1.bf16.msra.mxu0 %v705
        %895 = vmatprep.subr.bf16.mxu0 %v710
        %896 = vmatpush1.bf16.msra.mxu0 %v709
        %897 = vmatprep.subr.bf16.mxu0 %v714
        %898 = vmatpush1.bf16.msra.mxu0 %v713
        %899 = vmatprep.subr.bf16.mxu0 %v718
        %900 = vmatpush1.bf16.msra.mxu0 %v717
        %901 = vmatprep.subr.bf16.mxu0 %v722
        %902 = vmatpush1.bf16.msra.mxu0 %v721
        %903 = vmatprep.subr.bf16.mxu0 0
        %904 = vmatpush1.bf16.msra.mxu0 0
        %905 = vmatprep.subr.bf16.mxu0 0
        %906 = vmatpush1.bf16.msra.mxu0 0
        %907 = vmatprep.subr.bf16.mxu0 0
        %908 = vmatpush1.bf16.msra.mxu0 0
        %909 = vmatprep.subr.bf16.mxu0 0
        %910 = vmatpush1.bf16.msra.mxu0 0
        %911 = vmatprep.subr.bf16.mxu0 0
        %912 = vmatpush1.bf16.msra.mxu0 0
        %913 = vmatprep.subr.bf16.mxu0 0
        %914 = vmatpush1.bf16.msra.mxu0 0
        %915 = vmatprep.subr.bf16.mxu0 0
        %916 = vmatpush1.bf16.msra.mxu0 0
        %917 = vmatprep.subr.bf16.mxu0 0
        %918 = vmatpush1.bf16.msra.mxu0 0
        %919 = vmatprep.mubr.bf16.mxu0 0
        %920 = vmatmul.mubr.bf16.gmra.mrb[0].mxu0 %v886
        %v921 = vpop.f32.mrb[0].mxu0
        %v922 = vadd.f32 0.0, %v921
        %v923 = vpop.f32.mrb[0].mxu0
        %v924 = vadd.f32 0.0, %v923
        %v925 = vpop.f32.mrb[0].mxu0
        %v926 = vpop.f32.mrb[0].mxu0
        %927 = vdwg.mxu0
        %928 = vmatprep.subr.bf16.mxu0 %v696
        %929 = vmatpush1.bf16.msra.mxu0 %v695
        %930 = vmatprep.subr.bf16.mxu0 %v700
        %931 = vmatpush1.bf16.msra.mxu0 %v699
        %932 = vmatprep.subr.bf16.mxu0 %v704
        %933 = vmatpush1.bf16.msra.mxu0 %v703
        %934 = vmatprep.subr.bf16.mxu0 %v708
        %935 = vmatpush1.bf16.msra.mxu0 %v707
        %936 = vmatprep.subr.bf16.mxu0 %v712
        %937 = vmatpush1.bf16.msra.mxu0 %v711
        %938 = vmatprep.subr.bf16.mxu0 %v716
        %939 = vmatpush1.bf16.msra.mxu0 %v715
        %940 = vmatprep.subr.bf16.mxu0 %v720
        %941 = vmatpush1.bf16.msra.mxu0 %v719
        %942 = vmatprep.subr.bf16.mxu0 %v724
        %943 = vmatpush1.bf16.msra.mxu0 %v723
        %944 = vmatprep.subr.bf16.mxu0 0
        %945 = vmatpush1.bf16.msra.mxu0 0
        %946 = vmatprep.subr.bf16.mxu0 0
        %947 = vmatpush1.bf16.msra.mxu0 0
        %948 = vmatprep.subr.bf16.mxu0 0
        %949 = vmatpush1.bf16.msra.mxu0 0
        %950 = vmatprep.subr.bf16.mxu0 0
        %951 = vmatpush1.bf16.msra.mxu0 0
        %952 = vmatprep.subr.bf16.mxu0 0
        %953 = vmatpush1.bf16.msra.mxu0 0
        %954 = vmatprep.subr.bf16.mxu0 0
        %955 = vmatpush1.bf16.msra.mxu0 0
        %956 = vmatprep.subr.bf16.mxu0 0
        %957 = vmatpush1.bf16.msra.mxu0 0
        %958 = vmatprep.subr.bf16.mxu0 0
        %959 = vmatpush1.bf16.msra.mxu0 0
        %960 = vmatprep.mubr.bf16.mxu0 0
        %961 = vmatmul.mubr.bf16.gmra.mrb[0].mxu0 %v886
        %v962 = vpop.f32.mrb[0].mxu0
        %v963 = vadd.f32 0.0, %v962
        %v964 = vpop.f32.mrb[0].mxu0
        %v965 = vadd.f32 0.0, %v964
        %v966 = vpop.f32.mrb[0].mxu0
        %v967 = vpop.f32.mrb[0].mxu0
        %968 = vdwg.mxu0
        %v969 = vadd.f32 %v882, %v922
        %v970 = vadd.f32 %v883, %v924
        %v971 = vadd.f32 %v884, %v963
        %v972 = vadd.f32 %v885, %v965
        %v973 = vxor.u32 %v969, 2147483648
        %v974 = vmul.f32 %v973, 1.442695
        %v975 = vpow.pop %v974
        %v976 = vadd.f32 %v975, 1.0
        %v977 = vrcp.pop %v976
        %v978 = vmul.f32 1.0, %v977
        %v979 = vxor.u32 %v970, 2147483648
        %v980 = vmul.f32 %v979, 1.442695
        %v981 = vpow.pop %v980
        %v982 = vadd.f32 %v981, 1.0
        %v983 = vrcp.pop %v982
        %v984 = vmul.f32 1.0, %v983
        %v985 = vtanh.pop %v971
        %v986 = vxor.u32 %v972, 2147483648
        %v987 = vmul.f32 %v986, 1.442695
        %v988 = vpow.pop %v987
        %v989 = vadd.f32 %v988, 1.0
        %v990 = vrcp.pop %v989
        %v991 = vmul.f32 1.0, %v990
        %v992 = vmul.f32 %v984, %v880
        %v993 = vmul.f32 %v978, %v985
        %v994 = vadd.f32 %v992, %v993
        %v995 = vtanh.pop %v994
        %v996 = vmul.f32 %v991, %v995
        %s997 = scalar_lea.vmem %s320, 8 [#allocation11]
        %998 = vst [vmem:[%s997] sm:$0xff] %v996
        %s999 = sadd.s32 %s868, 1
        %p1000 = scmp.lt.s32.totalorder %s999, 10
        %s1001 = scalar_select %p1000, 1, 0
        %s1002 = scvt.s32.f32 %s1001
        %v1003 = vstv %s1002
        %v1004 = vmul.f32 %v1003, %v996
        %s1005 = ssub.f32 1.0, %s1002
        %v1006 = vstv %s1005
        %v1007 = vmul.f32 %v1006, %v877
        %v1008 = vadd.f32 %v1004, %v1007
        %v1009 = vmul.f32 %v1003, %v994
        %v1010 = vmul.f32 %v1006, %v880
        %v1011 = vadd.f32 %v1009, %v1010
        %s1012 = scalar_lea.vmem [#allocation2], 64
        %v1013 = vld [vmem:[%s1012] sm:$0xff]
        %v1014 = vld [vmem:[%s1012 + $0x8] sm:$0xff]
        %v1015 = vld [vmem:[%s1012 + $0x10] sm:$0xff]
        %v1016 = vld [vmem:[%s1012 + $0x18] sm:$0xff]
        %v1017 = vpack.c.bf16 %v1008, %v1008
        %1018 = vmatprep.subr.bf16.mxu0 %v694
        %1019 = vmatpush1.bf16.msra.mxu0 %v693
        %1020 = vmatprep.subr.bf16.mxu0 %v698
        %1021 = vmatpush1.bf16.msra.mxu0 %v697
        %1022 = vmatprep.subr.bf16.mxu0 %v702
        %1023 = vmatpush1.bf16.msra.mxu0 %v701
        %1024 = vmatprep.subr.bf16.mxu0 %v706
        %1025 = vmatpush1.bf16.msra.mxu0 %v705
        %1026 = vmatprep.subr.bf16.mxu0 %v710
        %1027 = vmatpush1.bf16.msra.mxu0 %v709
        %1028 = vmatprep.subr.bf16.mxu0 %v714
        %1029 = vmatpush1.bf16.msra.mxu0 %v713
        %1030 = vmatprep.subr.bf16.mxu0 %v718
        %1031 = vmatpush1.bf16.msra.mxu0 %v717
        %1032 = vmatprep.subr.bf16.mxu0 %v722
        %1033 = vmatpush1.bf16.msra.mxu0 %v721
        %1034 = vmatprep.subr.bf16.mxu0 0
        %1035 = vmatpush1.bf16.msra.mxu0 0
        %1036 = vmatprep.subr.bf16.mxu0 0
        %1037 = vmatpush1.bf16.msra.mxu0 0
        %1038 = vmatprep.subr.bf16.mxu0 0
        %1039 = vmatpush1.bf16.msra.mxu0 0
        %1040 = vmatprep.subr.bf16.mxu0 0
        %1041 = vmatpush1.bf16.msra.mxu0 0
        %1042 = vmatprep.subr.bf16.mxu0 0
        %1043 = vmatpush1.bf16.msra.mxu0 0
        %1044 = vmatprep.subr.bf16.mxu0 0
        %1045 = vmatpush1.bf16.msra.mxu0 0
        %1046 = vmatprep.subr.bf16.mxu0 0
        %1047 = vmatpush1.bf16.msra.mxu0 0
        %1048 = vmatprep.subr.bf16.mxu0 0
        %1049 = vmatpush1.bf16.msra.mxu0 0
        %1050 = vmatprep.mubr.bf16.mxu0 0
        %1051 = vmatmul.mubr.bf16.gmra.mrb[0].mxu0 %v1017
        %v1052 = vpop.f32.mrb[0].mxu0
        %v1053 = vadd.f32 0.0, %v1052
        %v1054 = vpop.f32.mrb[0].mxu0
        %v1055 = vadd.f32 0.0, %v1054
        %v1056 = vpop.f32.mrb[0].mxu0
        %v1057 = vpop.f32.mrb[0].mxu0
        %1058 = vdwg.mxu0
        %1059 = vmatprep.subr.bf16.mxu0 %v696
        %1060 = vmatpush1.bf16.msra.mxu0 %v695
        %1061 = vmatprep.subr.bf16.mxu0 %v700
        %1062 = vmatpush1.bf16.msra.mxu0 %v699
        %1063 = vmatprep.subr.bf16.mxu0 %v704
        %1064 = vmatpush1.bf16.msra.mxu0 %v703
        %1065 = vmatprep.subr.bf16.mxu0 %v708
        %1066 = vmatpush1.bf16.msra.mxu0 %v707
        %1067 = vmatprep.subr.bf16.mxu0 %v712
        %1068 = vmatpush1.bf16.msra.mxu0 %v711
        %1069 = vmatprep.subr.bf16.mxu0 %v716
        %1070 = vmatpush1.bf16.msra.mxu0 %v715
        %1071 = vmatprep.subr.bf16.mxu0 %v720
        %1072 = vmatpush1.bf16.msra.mxu0 %v719
        %1073 = vmatprep.subr.bf16.mxu0 %v724
        %1074 = vmatpush1.bf16.msra.mxu0 %v723
        %1075 = vmatprep.subr.bf16.mxu0 0
        %1076 = vmatpush1.bf16.msra.mxu0 0
        %1077 = vmatprep.subr.bf16.mxu0 0
        %1078 = vmatpush1.bf16.msra.mxu0 0
        %1079 = vmatprep.subr.bf16.mxu0 0
        %1080 = vmatpush1.bf16.msra.mxu0 0
        %1081 = vmatprep.subr.bf16.mxu0 0
        %1082 = vmatpush1.bf16.msra.mxu0 0
        %1083 = vmatprep.subr.bf16.mxu0 0
        %1084 = vmatpush1.bf16.msra.mxu0 0
        %1085 = vmatprep.subr.bf16.mxu0 0
        %1086 = vmatpush1.bf16.msra.mxu0 0
        %1087 = vmatprep.subr.bf16.mxu0 0
        %1088 = vmatpush1.bf16.msra.mxu0 0
        %1089 = vmatprep.subr.bf16.mxu0 0
        %1090 = vmatpush1.bf16.msra.mxu0 0
        %1091 = vmatprep.mubr.bf16.mxu0 0
        %1092 = vmatmul.mubr.bf16.gmra.mrb[0].mxu0 %v1017
        %v1093 = vpop.f32.mrb[0].mxu0
        %v1094 = vadd.f32 0.0, %v1093
        %v1095 = vpop.f32.mrb[0].mxu0
        %v1096 = vadd.f32 0.0, %v1095
        %v1097 = vpop.f32.mrb[0].mxu0
        %v1098 = vpop.f32.mrb[0].mxu0
        %1099 = vdwg.mxu0
        %v1100 = vadd.f32 %v1013, %v1053
        %v1101 = vadd.f32 %v1014, %v1055
        %v1102 = vadd.f32 %v1015, %v1094
        %v1103 = vadd.f32 %v1016, %v1096
        %v1104 = vxor.u32 %v1100, 2147483648
        %v1105 = vmul.f32 %v1104, 1.442695
        %v1106 = vpow.pop %v1105
        %v1107 = vadd.f32 %v1106, 1.0
        %v1108 = vrcp.pop %v1107
        %v1109 = vmul.f32 1.0, %v1108
        %v1110 = vxor.u32 %v1101, 2147483648
        %v1111 = vmul.f32 %v1110, 1.442695
        %v1112 = vpow.pop %v1111
        %v1113 = vadd.f32 %v1112, 1.0
        %v1114 = vrcp.pop %v1113
        %v1115 = vmul.f32 1.0, %v1114
        %v1116 = vtanh.pop %v1102
        %v1117 = vxor.u32 %v1103, 2147483648
        %v1118 = vmul.f32 %v1117, 1.442695
        %v1119 = vpow.pop %v1118
        %v1120 = vadd.f32 %v1119, 1.0
        %v1121 = vrcp.pop %v1120
        %v1122 = vmul.f32 1.0, %v1121
        %v1123 = vmul.f32 %v1115, %v1011
        %v1124 = vmul.f32 %v1109, %v1116
        %v1125 = vadd.f32 %v1123, %v1124
        %v1126 = vtanh.pop %v1125
        %v1127 = vmul.f32 %v1122, %v1126
        %s1128 = scalar_lea.vmem %s320, 16 [#allocation11]
        %1129 = vst [vmem:[%s1128] sm:$0xff] %v1127
        %s1130 = sadd.s32 %s868, 2
        %p1131 = scmp.lt.s32.totalorder %s1130, 10
        %s1132 = scalar_select %p1131, 1, 0
        %s1133 = scvt.s32.f32 %s1132
        %v1134 = vstv %s1133
        %v1135 = vmul.f32 %v1134, %v1127
        %s1136 = ssub.f32 1.0, %s1133
        %v1137 = vstv %s1136
        %v1138 = vmul.f32 %v1137, %v1008
        %v1139 = vadd.f32 %v1135, %v1138
        %v1140 = vmul.f32 %v1134, %v1125
        %v1141 = vmul.f32 %v1137, %v1011
        %v1142 = vadd.f32 %v1140, %v1141
        %s1143 = scalar_lea.vmem [#allocation2], 96
        %v1144 = vld [vmem:[%s1143] sm:$0xff]
        %v1145 = vld [vmem:[%s1143 + $0x8] sm:$0xff]
        %v1146 = vld [vmem:[%s1143 + $0x10] sm:$0xff]
        %v1147 = vld [vmem:[%s1143 + $0x18] sm:$0xff]
        %v1148 = vpack.c.bf16 %v1139, %v1139
        %1149 = vmatprep.subr.bf16.mxu0 %v694
        %1150 = vmatpush1.bf16.msra.mxu0 %v693
        %1151 = vmatprep.subr.bf16.mxu0 %v698
        %1152 = vmatpush1.bf16.msra.mxu0 %v697
        %1153 = vmatprep.subr.bf16.mxu0 %v702
        %1154 = vmatpush1.bf16.msra.mxu0 %v701
        %1155 = vmatprep.subr.bf16.mxu0 %v706
        %1156 = vmatpush1.bf16.msra.mxu0 %v705
        %1157 = vmatprep.subr.bf16.mxu0 %v710
        %1158 = vmatpush1.bf16.msra.mxu0 %v709
        %1159 = vmatprep.subr.bf16.mxu0 %v714
        %1160 = vmatpush1.bf16.msra.mxu0 %v713
        %1161 = vmatprep.subr.bf16.mxu0 %v718
        %1162 = vmatpush1.bf16.msra.mxu0 %v717
        %1163 = vmatprep.subr.bf16.mxu0 %v722
        %1164 = vmatpush1.bf16.msra.mxu0 %v721
        %1165 = vmatprep.subr.bf16.mxu0 0
        %1166 = vmatpush1.bf16.msra.mxu0 0
        %1167 = vmatprep.subr.bf16.mxu0 0
        %1168 = vmatpush1.bf16.msra.mxu0 0
        %1169 = vmatprep.subr.bf16.mxu0 0
        %1170 = vmatpush1.bf16.msra.mxu0 0
        %1171 = vmatprep.subr.bf16.mxu0 0
        %1172 = vmatpush1.bf16.msra.mxu0 0
        %1173 = vmatprep.subr.bf16.mxu0 0
        %1174 = vmatpush1.bf16.msra.mxu0 0
        %1175 = vmatprep.subr.bf16.mxu0 0
        %1176 = vmatpush1.bf16.msra.mxu0 0
        %1177 = vmatprep.subr.bf16.mxu0 0
        %1178 = vmatpush1.bf16.msra.mxu0 0
        %1179 = vmatprep.subr.bf16.mxu0 0
        %1180 = vmatpush1.bf16.msra.mxu0 0
        %1181 = vmatprep.mubr.bf16.mxu0 0
        %1182 = vmatmul.mubr.bf16.gmra.mrb[0].mxu0 %v1148
        %v1183 = vpop.f32.mrb[0].mxu0
        %v1184 = vadd.f32 0.0, %v1183
        %v1185 = vpop.f32.mrb[0].mxu0
        %v1186 = vadd.f32 0.0, %v1185
        %v1187 = vpop.f32.mrb[0].mxu0
        %v1188 = vpop.f32.mrb[0].mxu0
        %1189 = vdwg.mxu0
        %1190 = vmatprep.subr.bf16.mxu0 %v696
        %1191 = vmatpush1.bf16.msra.mxu0 %v695
        %1192 = vmatprep.subr.bf16.mxu0 %v700
        %1193 = vmatpush1.bf16.msra.mxu0 %v699
        %1194 = vmatprep.subr.bf16.mxu0 %v704
        %1195 = vmatpush1.bf16.msra.mxu0 %v703
        %1196 = vmatprep.subr.bf16.mxu0 %v708
        %1197 = vmatpush1.bf16.msra.mxu0 %v707
        %1198 = vmatprep.subr.bf16.mxu0 %v712
        %1199 = vmatpush1.bf16.msra.mxu0 %v711
        %1200 = vmatprep.subr.bf16.mxu0 %v716
        %1201 = vmatpush1.bf16.msra.mxu0 %v715
        %1202 = vmatprep.subr.bf16.mxu0 %v720
        %1203 = vmatpush1.bf16.msra.mxu0 %v719
        %1204 = vmatprep.subr.bf16.mxu0 %v724
        %1205 = vmatpush1.bf16.msra.mxu0 %v723
        %1206 = vmatprep.subr.bf16.mxu0 0
        %1207 = vmatpush1.bf16.msra.mxu0 0
        %1208 = vmatprep.subr.bf16.mxu0 0
        %1209 = vmatpush1.bf16.msra.mxu0 0
        %1210 = vmatprep.subr.bf16.mxu0 0
        %1211 = vmatpush1.bf16.msra.mxu0 0
        %1212 = vmatprep.subr.bf16.mxu0 0
        %1213 = vmatpush1.bf16.msra.mxu0 0
        %1214 = vmatprep.subr.bf16.mxu0 0
        %1215 = vmatpush1.bf16.msra.mxu0 0
        %1216 = vmatprep.subr.bf16.mxu0 0
        %1217 = vmatpush1.bf16.msra.mxu0 0
        %1218 = vmatprep.subr.bf16.mxu0 0
        %1219 = vmatpush1.bf16.msra.mxu0 0
        %1220 = vmatprep.subr.bf16.mxu0 0
        %1221 = vmatpush1.bf16.msra.mxu0 0
        %1222 = vmatprep.mubr.bf16.mxu0 0
        %1223 = vmatmul.mubr.bf16.gmra.mrb[0].mxu0 %v1148
        %v1224 = vpop.f32.mrb[0].mxu0
        %v1225 = vadd.f32 0.0, %v1224
        %v1226 = vpop.f32.mrb[0].mxu0
        %v1227 = vadd.f32 0.0, %v1226
        %v1228 = vpop.f32.mrb[0].mxu0
        %v1229 = vpop.f32.mrb[0].mxu0
        %1230 = vdwg.mxu0
        %v1231 = vadd.f32 %v1144, %v1184
        %v1232 = vadd.f32 %v1145, %v1186
        %v1233 = vadd.f32 %v1146, %v1225
        %v1234 = vadd.f32 %v1147, %v1227
        %v1235 = vxor.u32 %v1231, 2147483648
        %v1236 = vmul.f32 %v1235, 1.442695
        %v1237 = vpow.pop %v1236
        %v1238 = vadd.f32 %v1237, 1.0
        %v1239 = vrcp.pop %v1238
        %v1240 = vmul.f32 1.0, %v1239
        %v1241 = vxor.u32 %v1232, 2147483648
        %v1242 = vmul.f32 %v1241, 1.442695
        %v1243 = vpow.pop %v1242
        %v1244 = vadd.f32 %v1243, 1.0
        %v1245 = vrcp.pop %v1244
        %v1246 = vmul.f32 1.0, %v1245
        %v1247 = vtanh.pop %v1233
        %v1248 = vxor.u32 %v1234, 2147483648
        %v1249 = vmul.f32 %v1248, 1.442695
        %v1250 = vpow.pop %v1249
        %v1251 = vadd.f32 %v1250, 1.0
        %v1252 = vrcp.pop %v1251
        %v1253 = vmul.f32 1.0, %v1252
        %v1254 = vmul.f32 %v1246, %v1142
        %v1255 = vmul.f32 %v1240, %v1247
        %v1256 = vadd.f32 %v1254, %v1255
        %v1257 = vtanh.pop %v1256
        %v1258 = vmul.f32 %v1253, %v1257
        %s1259 = scalar_lea.vmem %s320, 24 [#allocation11]
        %1260 = vst [vmem:[%s1259] sm:$0xff] %v1258
        %s1261 = sadd.s32 %s868, 3
        %p1262 = scmp.lt.s32.totalorder %s1261, 10
        %s1263 = scalar_select %p1262, 1, 0
        %s1264 = scvt.s32.f32 %s1263
        %v1265 = vstv %s1264
        %v1266 = vmul.f32 %v1265, %v1258
        %s1267 = ssub.f32 1.0, %s1264
        %v1268 = vstv %s1267
        %v1269 = vmul.f32 %v1268, %v1139
        %v1270 = vadd.f32 %v1266, %v1269
        %v1271 = vmul.f32 %v1265, %v1256
        %v1272 = vmul.f32 %v1268, %v1142
        %v1273 = vadd.f32 %v1271, %v1272
        %1274 = vst [vmem:[#allocation3] sm:$0xff] %v1270
        %1275 = vst [vmem:[#allocation4] sm:$0xff] %v1273
        %p1276 = scmp.eq.s32.totalorder %s33, 2
        // Predicated region
        $region53: #{tpu_custom_call.1} parent=35 // pred_check
          %p1277 = pneg %p1276
        $region54: #{tpu_custom_call.1} parent=35 // pred_check_branch
          %1279 = sbr.rel (%p1277) target = $region56
        $region55: #{tpu_custom_call.1} parent=35 // pred_region
          %1280 = vst [vmem:[%s327] sm:$0xff] %v1270
          %1281 = vst [vmem:[%s334] sm:$0xff] %v1273
        $region56: #{tpu_custom_call.1} parent=35 // pred_fallthru
          _
        %s1282 = sand.u32 %s141, 1
        %s1283 = scalar_lea.sflag [#allocation7], %s1282
        %s1284 = sand.u32 %s141, 1
        %s1285 = smul.addr %s1284, 32
        %s1286 = scalar_lea.vmem [#allocation11], %s1285
        %s1287 = sand.u32 %s28, 1
        %s1288 = scalar_lea.sflag [#allocation13], %s1287
        %s1289 = sand.u32 %s167, 1
        %s1290 = smul.addr %s1289, 8
        %s1291 = scalar_lea.vmem [#allocation12], %s1290
        %s1292 = sand.u32 %s28, 1
        %s1293 = scalar_lea.sflag [#allocation13], %s1292
        %s1294 = sand.u32 %s193, 1
        %s1295 = smul.addr %s1294, 8
        %s1296 = scalar_lea.vmem [#allocation14], %s1295
        // Predicated region
        $region57: #{tpu_custom_call.1} parent=35 // pred_check
          %p1297 = pneg %p151
        $region58: #{tpu_custom_call.1} parent=35 // pred_check_branch
          %1299 = sbr.rel (%p1297) target = $region60
        $region59: #{tpu_custom_call.1} parent=35 // pred_region
          %s1300 = smul.u32 4, %s33
          %s1302 = ssub.s32 512, 512
          %1303 = vsyncadd %s1283, %s1302
          %s1304 = smul.addr %s1300, 2
          %s1305 = sadd.s32 %s32, %s1304
          %s1306 = smul.addr %s1305, 128
          %s1307 = scalar_lea.hbm %s4, %s1306
          %s1308 = sshll.u32 %s1286, 4
          %s1309 = int_to_ptr.vmem [resolvable:$true] %s1308
          %1314 = dma.vmem_to_hbm [thread:$0]  %s1309, 512, %s1307, %s1283, 128, 256, 8
        $region60: #{tpu_custom_call.1} parent=35 // pred_fallthru
          _
        // Predicated region
        $region61: #{tpu_custom_call.1} parent=35 // pred_check
          %p1315 = pneg %p177
        $region62: #{tpu_custom_call.1} parent=35 // pred_check_branch
          %1317 = sbr.rel (%p1315) target = $region64
        $region63: #{tpu_custom_call.1} parent=35 // pred_region
          %s1319 = ssub.s32 128, 128
          %1320 = vsyncadd %s1288, %s1319
          %s1321 = smul.addr %s32, 128
          %s1322 = scalar_lea.hbm %s5, %s1321
          %s1324 = sshll.u32 %s1291, 4
          %s1325 = int_to_ptr.vmem [resolvable:$true] %s1324
          %1327 = dma.vmem_to_hbm [thread:$0]  %s1325, 128, %s1322, %s1288
        $region64: #{tpu_custom_call.1} parent=35 // pred_fallthru
          _
        // Predicated region
        $region65: #{tpu_custom_call.1} parent=35 // pred_check
          %p1328 = pneg %p203
        $region66: #{tpu_custom_call.1} parent=35 // pred_check_branch
          %1330 = sbr.rel (%p1328) target = $region68
        $region67: #{tpu_custom_call.1} parent=35 // pred_region
          %s1332 = ssub.s32 128, 128
          %1333 = vsyncadd %s1293, %s1332
          %s1334 = smul.addr %s32, 128
          %s1335 = scalar_lea.hbm %s6, %s1334
          %s1337 = sshll.u32 %s1296, 4
          %s1338 = int_to_ptr.vmem [resolvable:$true] %s1337
          %1340 = dma.vmem_to_hbm [thread:$0]  %s1338, 128, %s1335, %s1293
        $region68: #{tpu_custom_call.1} parent=35 // pred_fallthru
          _
      $region36: #{tpu_custom_call.1} parent=5 // pred_fallthru
        _
      %p1341 = scmp.le.s32.totalorder 2, %s23
      // Predicated region
      $region69: #{tpu_custom_call.1} parent=5 // pred_check
        %p1342 = pneg %p1341
      $region70: #{tpu_custom_call.1} parent=5 // pred_check_branch
        %1344 = sbr.rel (%p1342) target = $region72
      $region71: #{tpu_custom_call.1} parent=5 // pred_region
        %s1345 = ssub.s32 %s23, 2
        // Predicated region
        $region73: #{tpu_custom_call.1} parent=71 // pred_check
          %p1346 = pneg %p157
        $region74: #{tpu_custom_call.1} parent=71 // pred_check_branch
          %1348 = sbr.rel (%p1346) target = $region76
        $region75: #{tpu_custom_call.1} parent=71 // pred_region
          %s1349 = sand.u32 %s142, 1
          %s1350 = scalar_lea.sflag [#allocation7], %s1349
          %s1351 = sand.u32 %s142, 1
          %s1352 = smul.addr %s1351, 32
          %s1353 = scalar_lea.vmem [#allocation11], %s1352
          %1354 = dma.done %s1350, 512
        $region76: #{tpu_custom_call.1} parent=71 // pred_fallthru
          _
        // Predicated region
        $region77: #{tpu_custom_call.1} parent=71 // pred_check
          %p1355 = pneg %p183
        $region78: #{tpu_custom_call.1} parent=71 // pred_check_branch
          %1357 = sbr.rel (%p1355) target = $region80
        $region79: #{tpu_custom_call.1} parent=71 // pred_region
          %s1358 = sand.u32 %s29, 1
          %s1359 = scalar_lea.sflag [#allocation13], %s1358
          %s1360 = sand.u32 %s168, 1
          %s1361 = smul.addr %s1360, 8
          %s1362 = scalar_lea.vmem [#allocation12], %s1361
          %1363 = dma.done %s1359, 128
        $region80: #{tpu_custom_call.1} parent=71 // pred_fallthru
          _
        // Predicated region
        $region81: #{tpu_custom_call.1} parent=71 // pred_check
          %p1364 = pneg %p209
        $region82: #{tpu_custom_call.1} parent=71 // pred_check_branch
          %1366 = sbr.rel (%p1364) target = $region84
        $region83: #{tpu_custom_call.1} parent=71 // pred_region
          %s1367 = sand.u32 %s29, 1
          %s1368 = scalar_lea.sflag [#allocation13], %s1367
          %s1369 = sand.u32 %s194, 1
          %s1370 = smul.addr %s1369, 8
          %s1371 = scalar_lea.vmem [#allocation14], %s1370
          %1372 = dma.done %s1368, 128
        $region84: #{tpu_custom_call.1} parent=71 // pred_fallthru
          _
      $region72: #{tpu_custom_call.1} parent=5 // pred_fallthru
        _
    $region6: #{tpu_custom_call.1} parent=1 // loop_footer
      %s27 = sadd.s32 1, %s23
    $region7: #{tpu_custom_call.1} parent=1 // loop_footer_branch
      %22 = sbr.rel target = $region3
    $region8: #{tpu_custom_call.1} parent=1 // loop_exit
      _
    %1373 = vsyncpa [#allocation6], 1
    %s1374 = scalar_lea.sflag [#allocation6], 1
    %1375 = vsyncpa %s1374, 1
    %1376 = vsyncpa [#allocation9], 1
    %1377 = vsyncpa [#allocation7], 1
    %s1378 = scalar_lea.sflag [#allocation7], 1
    %1379 = vsyncpa %s1378, 1
    %1380 = vsyncpa [#allocation13], 1
    %s1381 = scalar_lea.sflag [#allocation13], 1
    %1382 = vsyncpa %s1381, 1

</llo_original>
